<compile_context>
chip_gen: v6e
topology: v6e:2x2x1
jax: 0.10.0
libtpu: 0.0.40
codegen_flags: <defaults>
</compile_context>

<pallas_src>
import functools
import numpy as np
import jax
import jax.numpy as jnp
from jax.experimental import pallas as pl
from jax.experimental.pallas import tpu as pltpu

ACT_CODES = {"sigmoid": 0, "tanh": 1, "relu": 2}   # anything else -> 3 (identity)

N_PAD = 128     # lane-padded node space: one vreg lane dim, exact MXU K/N tile
TB_MAX = 128    # batch rows per grid step (keeps the level-matmul result at 16 vregs)


def _neat_kernel(levels, x_ref, w_ref, out_ref):
    """Per-topological-level MXU evaluation of a NEAT genome.

    levels:  static tuple; each level is a tuple of (act_code, lane_off, width)
             activation groups occupying contiguous lanes.
    x_ref:   VMEM f32 [TB, N_PAD]    initial node values (inputs + constant-1 bias lane)
    w_ref:   VMEM f32 [N_PAD, N_PAD] dense weights W[src_lane, dst_lane] (bias folded
             into the bias lane's row)
    out_ref: VMEM f32 [TB, N_PAD]    node-value slab, used as the working state
    """
    out_ref[...] = x_ref[...]
    for groups in levels:
        # One MXU matmul resolves every node of this level (columns belonging to
        # other levels are computed too and simply ignored).  HIGHEST precision
        # keeps full f32 accuracy on the MXU.
        h = jnp.dot(out_ref[...], w_ref[...],
                    preferred_element_type=jnp.float32,
                    precision=jax.lax.Precision.HIGHEST)
        for act_code, off, width in groups:
            blk = h[:, off:off + width]
            if act_code == 0:
                blk = jax.nn.sigmoid(blk)
            elif act_code == 1:
                blk = jnp.tanh(blk)
            elif act_code == 2:
                blk = jnp.maximum(blk, 0.0)
            # identity: leave as-is
            out_ref[:, off:off + width] = blk


class NeatNetworkPallas:
    """Pallas/TPU mirror of NeatNetworkGPU.forward (single vector or batch of vectors)."""

    def __init__(self, connections, node_evals, num_inputs, num_outputs):
        self.connections = connections       # unused by forward, kept for parity
        self.num_inputs = int(num_inputs)
        self.num_outputs = int(num_outputs)

        # ---- Pass 1: replicate the torch forward's sequential / skip-if-present
        # semantics, validate sources, and assign each surviving step a level. ----
        evaluated = set(range(self.num_inputs))
        level_of = {}                 # node_id -> topological level
        steps = []                    # (node_id, bias, act_str, valid_in_list, level)
        for node_id, bias, _agg, activation, in_list in node_evals:
            if node_id in evaluated:
                continue
            evaluated.add(node_id)
            valid = []
            lvl = 0
            for src, wgt in in_list:
                if 0 <= src < self.num_inputs:
                    valid.append((src, float(wgt)))          # input value
                elif src in level_of:                        # defined at an earlier step
                    valid.append((src, float(wgt)))
                    lvl = max(lvl, level_of[src] + 1)
                # else: not-yet / never defined -> reads 0 in the reference; drop.
            level_of[node_id] = lvl
            steps.append((node_id, float(bias), activation, valid, lvl))

        # ---- Pass 2: lane assignment — [inputs | bias | level 0 | level 1 | ...],
        # nodes within a level grouped by activation (one transcendental slab each). ----
        n_levels = (max(level_of.values()) + 1) if steps else 0
        lane_of = {i: i for i in range(self.num_inputs)}
        bias_lane = self.num_inputs
        next_lane = bias_lane + 1
        per_level = [[] for _ in range(n_levels)]
        for nid, bias, act, valid, lvl in steps:
            per_level[lvl].append((nid, bias, act, valid))

        levels_meta = []
        for lvl_nodes in per_level:
            groups = {}
            for nid, bias, act, valid in lvl_nodes:
                groups.setdefault(ACT_CODES.get(act, 3), []).append((nid, bias, act, valid))
            level_groups = []
            for act_code, nodes in groups.items():
                off = next_lane
                for nid, _bias, _act, _valid in nodes:
                    lane_of[nid] = next_lane
                    next_lane += 1
                level_groups.append((act_code, off, len(nodes)))
            levels_meta.append(tuple(level_groups))

        if next_lane > N_PAD:
            # TODO(synk): bump N_PAD to 256 (v6e/v7x MXU-native width) for genomes
            # with more than 127 live nodes instead of raising.
            raise ValueError(f"genome needs {next_lane} lanes, exceeds N_PAD={N_PAD}")

        # ---- Densify weights: W[src_lane, dst_lane]; bias folded into bias-lane row. ----
        w_dense = np.zeros((N_PAD, N_PAD), np.float32)
        for nid, bias, _act, valid, _lvl in steps:
            j = lane_of[nid]
            w_dense[bias_lane, j] = np.float32(bias)
            for src, wgt in valid:
                w_dense[lane_of[src], j] += np.float32(wgt)

        # ---- Output gather metadata (undefined outputs read 0, as in the reference). ----
        out_lanes = np.zeros((self.num_outputs,), np.int32)
        out_mask = np.zeros((self.num_outputs,), np.float32)
        for k, oid in enumerate(range(self.num_inputs, self.num_inputs + self.num_outputs)):
            if oid in lane_of:
                out_lanes[k] = lane_of[oid]
                out_mask[k] = 1.0

        self._levels = tuple(levels_meta)
        self._bias_lane = bias_lane
        self._w_dense = jnp.asarray(w_dense)
        self._out_lanes = jnp.asarray(out_lanes)
        self._out_mask = jnp.asarray(out_mask)
        self._compiled = {}                   # batch size b -> jitted callable

    def _build(self, b):
        if b <= TB_MAX:
            tb = max(8, -(-b // 8) * 8)       # f32 sublane multiple
            b_pad = tb
        else:
            tb = TB_MAX
            b_pad = -(-b // tb) * tb
        grid = b_pad // tb

        kernel = functools.partial(_neat_kernel, self._levels)
        call = pl.pallas_call(
            kernel,
            out_shape=jax.ShapeDtypeStruct((b_pad, N_PAD), jnp.float32),
            grid=(grid,),
            in_specs=[
                pl.BlockSpec((tb, N_PAD), lambda i: (i, 0)),       # node-value tile
                pl.BlockSpec((N_PAD, N_PAD), lambda i: (0, 0)),    # dense weights (resident)
            ],
            out_specs=pl.BlockSpec((tb, N_PAD), lambda i: (i, 0)),
            compiler_params=pltpu.CompilerParams(dimension_semantics=("parallel",)),
        )

        num_inputs = self.num_inputs
        bias_lane = self._bias_lane
        out_lanes = self._out_lanes
        out_mask = self._out_mask

        @jax.jit
        def run(arr, w):
            # arr: (b, num_inputs) f32 — pad, bias-lane fill and output gather on device.
            x = jnp.zeros((b_pad, N_PAD), jnp.float32)
            x = x.at[:b, :num_inputs].set(arr)
            x = x.at[:, bias_lane].set(1.0)
            vals = call(x, w)
            return jnp.take(vals[:b], out_lanes, axis=1) * out_mask

        return run

    def forward(self, inputs):
        arr = jnp.asarray(inputs, jnp.float32)
        single = arr.ndim == 1
        if single:
            arr = arr[None, :]
        arr = arr[:, : self.num_inputs]
        b = int(arr.shape[0])
        if b not in self._compiled:
            self._compiled[b] = self._build(b)
        out = self._compiled[b](arr, self._w_dense)
        return out[0] if single else out

    __call__ = forward


def neat_forward_ref(inputs, node_evals, num_inputs, num_outputs):
    """Pure-numpy mirror of the PyTorch forward (for correctness checking)."""
    node_values = {i: float(v) for i, v in enumerate(inputs)}
    for node_id, bias, _agg, activation, in_list in node_evals:
        if node_id in node_values:
            continue
        node_sum = bias
        for i, w in in_list:
            node_sum += node_values.get(i, 0.0) * w
        if activation == "sigmoid":
            node_values[node_id] = 1.0 / (1.0 + np.exp(-node_sum))
        elif activation == "tanh":
            node_values[node_id] = np.tanh(node_sum)
        elif activation == "relu":
            node_values[node_id] = max(node_sum, 0.0)
        else:
            node_values[node_id] = node_sum
    return np.array(
        [node_values.get(i, 0.0) for i in range(num_inputs, num_inputs + num_outputs)],
        np.float32,
    )


if __name__ == "__main__":
    num_inputs, num_outputs = 12, 6
    key = jax.random.PRNGKey(0)
    k_in, k_w, k_b, k_batch, k_big = jax.random.split(key, 5)

    inputs = np.asarray(jax.random.normal(k_in, (num_inputs,), jnp.float32))

    # Deterministic synthetic NEAT genome.
    wkeys = jax.random.split(k_w, 64)
    bkeys = jax.random.split(k_b, 16)
    _wi = iter(range(64))
    _bi = iter(range(16))
    w = lambda: float(jax.random.normal(wkeys[next(_wi)], ()))
    b = lambda: float(jax.random.normal(bkeys[next(_bi)], ()) * 0.1)

    output_ids = list(range(num_inputs, num_inputs + num_outputs))  # 12..17
    node_evals = [
        (18, b(), "sum", "tanh",     [(0, w()), (1, w()), (2, w()), (3, w())]),
        (19, b(), "sum", "relu",     [(4, w()), (5, w()), (6, w()), (7, w())]),
        (20, b(), "sum", "sigmoid",  [(8, w()), (9, w()), (10, w()), (11, w())]),
        (21, b(), "sum", "identity", [(18, w()), (19, w()), (22, w())]),  # 22 never defined -> 0
        (5,  b(), "sum", "relu",     [(0, w())]),  # node id already present -> skipped
    ]
    out_acts = ["sigmoid", "tanh", "relu", "identity", "sigmoid", "tanh"]
    for j, oid in enumerate(output_ids):
        node_evals.append(
            (oid, b(), "sum", out_acts[j],
             [(18, w()), (19, w()), (20, w()), (21, w()), (j, w())])
        )
    connections = None  # unused by forward, as in the PyTorch module

    net = NeatNetworkPallas(connections, node_evals, num_inputs, num_outputs)

    # Single-vector forward (matches the PyTorch module's call signature).
    out = jax.block_until_ready(net(inputs))
    ref = neat_forward_ref(inputs, node_evals, num_inputs, num_outputs)
    np.testing.assert_allclose(np.asarray(out), ref, rtol=1e-4, atol=1e-5)

    # Small batched forward (sublane batch, single grid step).
    batch = np.asarray(jax.random.normal(k_batch, (4, num_inputs), jnp.float32))
    out_b = jax.block_until_ready(net(batch))
    for r in range(batch.shape[0]):
        ref_r = neat_forward_ref(batch[r], node_evals, num_inputs, num_outputs)
        np.testing.assert_allclose(np.asarray(out_b[r]), ref_r, rtol=1e-4, atol=1e-5)

    # Larger batch exercising the parallel batch grid (TB=128, grid=2, padded rows).
    big = np.asarray(jax.random.normal(k_big, (160, num_inputs), jnp.float32))
    out_big = jax.block_until_ready(net(big))
    for r in range(big.shape[0]):
        ref_r = neat_forward_ref(big[r], node_evals, num_inputs, num_outputs)
        np.testing.assert_allclose(np.asarray(out_big[r]), ref_r, rtol=1e-4, atol=1e-5)

    print("KERNEL_OK")
</pallas_src>

<mosaic_0001>
module attributes {stable_mosaic.version = 11 : i64} {
  func.func @_neat_kernel(%arg0: i32, %arg1: memref<8x128xf32, #tpu.memory_space<vmem>>, %arg2: memref<128x128xf32, #tpu.memory_space<vmem>>, %arg3: memref<8x128xf32, #tpu.memory_space<vmem>>) attributes {dimension_semantics = [#tpu.dimension_semantics<parallel>], iteration_bounds = array<i64: 1>, scalar_prefetch = 0 : i64, scratch_operands = 0 : i64, tpu.core_type = #tpu.core_type<tc>, window_params = [{transform_indices = @transform_0, window_bounds = array<i64: 8, 128>}, {pipeline_mode = #tpu.pipeline_mode<synchronous>, transform_indices = @transform_1, window_bounds = array<i64: 128, 128>}, {transform_indices = @transform_2, window_bounds = array<i64: 8, 128>}]} {
    %c0 = arith.constant 0 : index
    %c0_0 = arith.constant 0 : index
    %0 = vector.load %arg1[%c0, %c0_0] : memref<8x128xf32, #tpu.memory_space<vmem>>, vector<8x128xf32>
    %c0_1 = arith.constant 0 : index
    %c0_2 = arith.constant 0 : index
    %1 = vector.load %arg3[%c0_1, %c0_2] : memref<8x128xf32, #tpu.memory_space<vmem>>, vector<8x128xf32>
    tpu.vector_store %arg3[%c0_1, %c0_2], %0 {strides = array<i32>} : memref<8x128xf32, #tpu.memory_space<vmem>>, vector<8x128xf32>,
    %c0_3 = arith.constant 0 : index
    %c0_4 = arith.constant 0 : index
    %2 = vector.load %arg3[%c0_3, %c0_4] : memref<8x128xf32, #tpu.memory_space<vmem>>, vector<8x128xf32>
    %c0_5 = arith.constant 0 : index
    %c0_6 = arith.constant 0 : index
    %3 = vector.load %arg2[%c0_5, %c0_6] : memref<128x128xf32, #tpu.memory_space<vmem>>, vector<128x128xf32>
    %cst = arith.constant dense<0.000000e+00> : vector<8x128xf32>
    %4 = tpu.matmul %2, %3, %cst {dimension_numbers = #tpu.dot_dimension_numbers<[1], [0], [0], [1], [0, 0, 1, 1], [], []>, precision = #tpu.contract_precision<fp32>} : vector<8x128xf32>, vector<128x128xf32>, vector<8x128xf32> -> vector<8x128xf32>
    %5 = vector.extract_strided_slice %4 {offsets = [0, 13], sizes = [8, 1], strides = [1, 1]} : vector<8x128xf32> to vector<8x1xf32>
    %6 = math.tanh %5 : vector<8x1xf32>
    %c0_7 = arith.constant 0 : index
    %c13 = arith.constant 13 : index
    %7 = vector.load %arg3[%c0_7, %c13] : memref<8x128xf32, #tpu.memory_space<vmem>>, vector<8x1xf32>
    tpu.vector_store %arg3[%c0_7, %c13], %6 {strides = array<i32>} : memref<8x128xf32, #tpu.memory_space<vmem>>, vector<8x1xf32>,
    %8 = vector.extract_strided_slice %4 {offsets = [0, 14], sizes = [8, 1], strides = [1, 1]} : vector<8x128xf32> to vector<8x1xf32>
    %cst_8 = arith.constant 0.000000e+00 : f32
    %9 = vector.broadcast %cst_8 : f32 to vector<8x1xf32>
    %10 = arith.maximumf %8, %9 : vector<8x1xf32>
    %c0_9 = arith.constant 0 : index
    %c14 = arith.constant 14 : index
    %11 = vector.load %arg3[%c0_9, %c14] : memref<8x128xf32, #tpu.memory_space<vmem>>, vector<8x1xf32>
    tpu.vector_store %arg3[%c0_9, %c14], %10 {strides = array<i32>} : memref<8x128xf32, #tpu.memory_space<vmem>>, vector<8x1xf32>,
    %12 = vector.extract_strided_slice %4 {offsets = [0, 15], sizes = [8, 1], strides = [1, 1]} : vector<8x128xf32> to vector<8x1xf32>
    %13 = arith.negf %12 : vector<8x1xf32>
    %14 = math.exp %13 : vector<8x1xf32>
    %cst_10 = arith.constant 1.000000e+00 : f32
    %15 = vector.broadcast %cst_10 : f32 to vector<8x1xf32>
    %16 = arith.addf %15, %14 : vector<8x1xf32>
    %17 = arith.divf %15, %16 : vector<8x1xf32>
    %c0_11 = arith.constant 0 : index
    %c15 = arith.constant 15 : index
    %18 = vector.load %arg3[%c0_11, %c15] : memref<8x128xf32, #tpu.memory_space<vmem>>, vector<8x1xf32>
    tpu.vector_store %arg3[%c0_11, %c15], %17 {strides = array<i32>} : memref<8x128xf32, #tpu.memory_space<vmem>>, vector<8x1xf32>,
    %c0_12 = arith.constant 0 : index
    %c0_13 = arith.constant 0 : index
    %19 = vector.load %arg3[%c0_12, %c0_13] : memref<8x128xf32, #tpu.memory_space<vmem>>, vector<8x128xf32>
    %c0_14 = arith.constant 0 : index
    %c0_15 = arith.constant 0 : index
    %20 = vector.load %arg2[%c0_14, %c0_15] : memref<128x128xf32, #tpu.memory_space<vmem>>, vector<128x128xf32>
    %cst_16 = arith.constant dense<0.000000e+00> : vector<8x128xf32>
    %21 = tpu.matmul %19, %20, %cst_16 {dimension_numbers = #tpu.dot_dimension_numbers<[1], [0], [0], [1], [0, 0, 1, 1], [], []>, precision = #tpu.contract_precision<fp32>} : vector<8x128xf32>, vector<128x128xf32>, vector<8x128xf32> -> vector<8x128xf32>
    %22 = vector.extract_strided_slice %21 {offsets = [0, 16], sizes = [8, 1], strides = [1, 1]} : vector<8x128xf32> to vector<8x1xf32>
    %c0_17 = arith.constant 0 : index
    %c16 = arith.constant 16 : index
    %23 = vector.load %arg3[%c0_17, %c16] : memref<8x128xf32, #tpu.memory_space<vmem>>, vector<8x1xf32>
    tpu.vector_store %arg3[%c0_17, %c16], %22 {strides = array<i32>} : memref<8x128xf32, #tpu.memory_space<vmem>>, vector<8x1xf32>,
    %c0_18 = arith.constant 0 : index
    %c0_19 = arith.constant 0 : index
    %24 = vector.load %arg3[%c0_18, %c0_19] : memref<8x128xf32, #tpu.memory_space<vmem>>, vector<8x128xf32>
    %c0_20 = arith.constant 0 : index
    %c0_21 = arith.constant 0 : index
    %25 = vector.load %arg2[%c0_20, %c0_21] : memref<128x128xf32, #tpu.memory_space<vmem>>, vector<128x128xf32>
    %cst_22 = arith.constant dense<0.000000e+00> : vector<8x128xf32>
    %26 = tpu.matmul %24, %25, %cst_22 {dimension_numbers = #tpu.dot_dimension_numbers<[1], [0], [0], [1], [0, 0, 1, 1], [], []>, precision = #tpu.contract_precision<fp32>} : vector<8x128xf32>, vector<128x128xf32>, vector<8x128xf32> -> vector<8x128xf32>
    %27 = vector.extract_strided_slice %26 {offsets = [0, 17], sizes = [8, 2], strides = [1, 1]} : vector<8x128xf32> to vector<8x2xf32>
    %28 = arith.negf %27 : vector<8x2xf32>
    %29 = math.exp %28 : vector<8x2xf32>
    %cst_23 = arith.constant 1.000000e+00 : f32
    %30 = vector.broadcast %cst_23 : f32 to vector<8x2xf32>
    %31 = arith.addf %30, %29 : vector<8x2xf32>
    %32 = arith.divf %30, %31 : vector<8x2xf32>
    %c0_24 = arith.constant 0 : index
    %c17 = arith.constant 17 : index
    %33 = vector.load %arg3[%c0_24, %c17] : memref<8x128xf32, #tpu.memory_space<vmem>>, vector<8x2xf32>
    tpu.vector_store %arg3[%c0_24, %c17], %32 {strides = array<i32>} : memref<8x128xf32, #tpu.memory_space<vmem>>, vector<8x2xf32>,
    %34 = vector.extract_strided_slice %26 {offsets = [0, 19], sizes = [8, 2], strides = [1, 1]} : vector<8x128xf32> to vector<8x2xf32>
    %35 = math.tanh %34 : vector<8x2xf32>
    %c0_25 = arith.constant 0 : index
    %c19 = arith.constant 19 : index
    %36 = vector.load %arg3[%c0_25, %c19] : memref<8x128xf32, #tpu.memory_space<vmem>>, vector<8x2xf32>
    tpu.vector_store %arg3[%c0_25, %c19], %35 {strides = array<i32>} : memref<8x128xf32, #tpu.memory_space<vmem>>, vector<8x2xf32>,
    %37 = vector.extract_strided_slice %26 {offsets = [0, 21], sizes = [8, 1], strides = [1, 1]} : vector<8x128xf32> to vector<8x1xf32>
    %cst_26 = arith.constant 0.000000e+00 : f32
    %38 = vector.broadcast %cst_26 : f32 to vector<8x1xf32>
    %39 = arith.maximumf %37, %38 : vector<8x1xf32>
    %c0_27 = arith.constant 0 : index
    %c21 = arith.constant 21 : index
    %40 = vector.load %arg3[%c0_27, %c21] : memref<8x128xf32, #tpu.memory_space<vmem>>, vector<8x1xf32>
    tpu.vector_store %arg3[%c0_27, %c21], %39 {strides = array<i32>} : memref<8x128xf32, #tpu.memory_space<vmem>>, vector<8x1xf32>,
    %41 = vector.extract_strided_slice %26 {offsets = [0, 22], sizes = [8, 1], strides = [1, 1]} : vector<8x128xf32> to vector<8x1xf32>
    %c0_28 = arith.constant 0 : index
    %c22 = arith.constant 22 : index
    %42 = vector.load %arg3[%c0_28, %c22] : memref<8x128xf32, #tpu.memory_space<vmem>>, vector<8x1xf32>
    tpu.vector_store %arg3[%c0_28, %c22], %41 {strides = array<i32>} : memref<8x128xf32, #tpu.memory_space<vmem>>, vector<8x1xf32>,
    return
  }
  func.func @transform_0(%arg0: i32) -> (i32, i32) {
    %c0_i32 = arith.constant 0 : i32
    %c0_i32_0 = arith.constant 0 : i32
    return %arg0, %c0_i32 : i32, i32
  }
  func.func @transform_1(%arg0: i32) -> (i32, i32) {
    %c0_i32 = arith.constant 0 : i32
    %c0_i32_0 = arith.constant 0 : i32
    %c0_i32_1 = arith.constant 0 : i32
    return %c0_i32, %c0_i32_0 : i32, i32
  }
  func.func @transform_2(%arg0: i32) -> (i32, i32) {
    %c0_i32 = arith.constant 0 : i32
    %c0_i32_0 = arith.constant 0 : i32
    return %arg0, %c0_i32 : i32, i32
  }
}

</mosaic_0001>

<llo_original>
// kernel: run.1
$region0: #{run.1}
  #allocation0 [shape = 'u32[]', space=smem, size = 0x4, offset = 0x4, fixed_abs, tag = 'smem constant byte address 0x4 - core index']
  #allocation1 [shape = 'u32[144,128]{1,0:T(1,128)}', space=vmem, size = 0x12000, scoped, tag = 'internal scratch']
  %s0 = inlined_call_operand.vmem [shape: f32[8,128], index: 0, kind: input, shape index: {}]
  %s1 = inlined_call_operand.hbm [shape: f32[128,128], index: 1, kind: input, shape index: {}]
  %s2 = inlined_call_operand.vmem [shape: f32[8,128], index: 2, kind: output, shape index: {}]
  %s3 = sld [smem:[#allocation0]]
  $region22: #{run.1} parent=0
    _
  %s5 = ssub.s32 1, %s3
  %s6 = scalar_select 0, %s5, %s3
  $region1: #{run.1} parent=0
    #allocation2 [shape = 'u8[65536]{0}', space=vmem, size = 0x10000, scoped, tag = 'input window, operand 1, single buffered']
    #allocation3 [shape = 's32[1]{0}', space=sflag, size = 0x4, scoped, tag = 'scoped memory for run.1']
    %7 = vsyncpa [#allocation3], 0
    // Predicated region
    $region2: #{run.1} parent=1 // pred_check
      _
    $region3: #{run.1} parent=1 // pred_check_branch
      %9 = sbr.rel (0) target = $region5
    $region4: #{run.1} parent=1 // pred_region
      _
    $region5: #{run.1} parent=1 // pred_fallthru
      _
    // Predicated region
    $region6: #{run.1} parent=1 // pred_check
      _
    $region7: #{run.1} parent=1 // pred_check_branch
      %11 = sbr.rel (0) target = $region9
    $region8: #{run.1} parent=1 // pred_region
      %s13 = ssub.s32 2048, 2048
      %14 = vsyncadd [#allocation3], %s13
      %s15 = sshll.u32 [#allocation2], 4
      %s16 = int_to_ptr.vmem [resolvable:$true] %s15
      %21 = dma.hbm_to_vmem [thread:$0]  %s1, 2048, %s16, [#allocation3], 128, 128, 8
    $region9: #{run.1} parent=1 // pred_fallthru
      _
    // Predicated region
    $region10: #{run.1} parent=1 // pred_check
      _
    $region11: #{run.1} parent=1 // pred_check_branch
      %23 = sbr.rel (0) target = $region13
    $region12: #{run.1} parent=1 // pred_region
      %24 = dma.done [#allocation3], 2048
    $region13: #{run.1} parent=1 // pred_fallthru
      _
    %v25 = vld [vmem:[%s0] sm:$0xff]
    %26 = vst [vmem:[%s2] sm:$0xff] %v25
    %v27 = vld [vmem:[%s2] sm:$0xff]
    %v28 = vld [vmem:[#allocation2] sm:$0xff]
    %v29 = vld [vmem:[#allocation2 + $0x8] sm:$0xff]
    %v30 = vld [vmem:[#allocation2 + $0x10] sm:$0xff]
    %v31 = vld [vmem:[#allocation2 + $0x18] sm:$0xff]
    %v32 = vld [vmem:[#allocation2 + $0x20] sm:$0xff]
    %v33 = vld [vmem:[#allocation2 + $0x28] sm:$0xff]
    %v34 = vld [vmem:[#allocation2 + $0x30] sm:$0xff]
    %v35 = vld [vmem:[#allocation2 + $0x38] sm:$0xff]
    %v36 = vld [vmem:[#allocation2 + $0x40] sm:$0xff]
    %v37 = vld [vmem:[#allocation2 + $0x48] sm:$0xff]
    %v38 = vld [vmem:[#allocation2 + $0x50] sm:$0xff]
    %v39 = vld [vmem:[#allocation2 + $0x58] sm:$0xff]
    %v40 = vld [vmem:[#allocation2 + $0x60] sm:$0xff]
    %v41 = vld [vmem:[#allocation2 + $0x68] sm:$0xff]
    %v42 = vld [vmem:[#allocation2 + $0x70] sm:$0xff]
    %v43 = vld [vmem:[#allocation2 + $0x78] sm:$0xff]
    %44 = vmatprep.subr.mxu0 0.0
    %v45 = vand.u32 %v43, 4294901760
    %46 = vmatpush1.msra.mxu0 %v45
    %47 = vmatprep.subr.mxu0 0.0
    %v48 = vand.u32 %v42, 4294901760
    %49 = vmatpush1.msra.mxu0 %v48
    %50 = vmatprep.subr.mxu0 0.0
    %v51 = vand.u32 %v41, 4294901760
    %52 = vmatpush1.msra.mxu0 %v51
    %53 = vmatprep.subr.mxu0 0.0
    %v54 = vand.u32 %v40, 4294901760
    %55 = vmatpush1.msra.mxu0 %v54
    %56 = vmatprep.subr.mxu0 0.0
    %v57 = vand.u32 %v39, 4294901760
    %58 = vmatpush1.msra.mxu0 %v57
    %59 = vmatprep.subr.mxu0 0.0
    %v60 = vand.u32 %v38, 4294901760
    %61 = vmatpush1.msra.mxu0 %v60
    %62 = vmatprep.subr.mxu0 0.0
    %v63 = vand.u32 %v37, 4294901760
    %64 = vmatpush1.msra.mxu0 %v63
    %65 = vmatprep.subr.mxu0 0.0
    %v66 = vand.u32 %v36, 4294901760
    %67 = vmatpush1.msra.mxu0 %v66
    %68 = vmatprep.subr.mxu0 0.0
    %v69 = vand.u32 %v35, 4294901760
    %70 = vmatpush1.msra.mxu0 %v69
    %71 = vmatprep.subr.mxu0 0.0
    %v72 = vand.u32 %v34, 4294901760
    %73 = vmatpush1.msra.mxu0 %v72
    %74 = vmatprep.subr.mxu0 0.0
    %v75 = vand.u32 %v33, 4294901760
    %76 = vmatpush1.msra.mxu0 %v75
    %77 = vmatprep.subr.mxu0 0.0
    %v78 = vand.u32 %v32, 4294901760
    %79 = vmatpush1.msra.mxu0 %v78
    %80 = vmatprep.subr.mxu0 0.0
    %v81 = vand.u32 %v31, 4294901760
    %82 = vmatpush1.msra.mxu0 %v81
    %83 = vmatprep.subr.mxu0 0.0
    %v84 = vand.u32 %v30, 4294901760
    %85 = vmatpush1.msra.mxu0 %v84
    %86 = vmatprep.subr.mxu0 0.0
    %v87 = vand.u32 %v29, 4294901760
    %88 = vmatpush1.msra.mxu0 %v87
    %89 = vmatprep.subr.mxu0 0.0
    %v90 = vand.u32 %v28, 4294901760
    %91 = vmatpush1.msra.mxu0 %v90
    %92 = vmatprep.subr.mxu0 0.0
    %93 = vmatpush2.msra.mxu0 0.0
    %94 = vmatprep.subr.mxu0 0.0
    %95 = vmatpush2.msra.mxu0 0.0
    %96 = vmatprep.subr.mxu0 0.0
    %97 = vmatpush2.msra.mxu0 0.0
    %98 = vmatprep.subr.mxu0 0.0
    %99 = vmatpush2.msra.mxu0 0.0
    %100 = vmatprep.subr.mxu0 0.0
    %101 = vmatpush2.msra.mxu0 0.0
    %102 = vmatprep.subr.mxu0 0.0
    %103 = vmatpush2.msra.mxu0 0.0
    %104 = vmatprep.subr.mxu0 0.0
    %105 = vmatpush2.msra.mxu0 0.0
    %106 = vmatprep.subr.mxu0 0.0
    %107 = vmatpush2.msra.mxu0 0.0
    %108 = vmatprep.subr.mxu0 0.0
    %109 = vmatpush2.msra.mxu0 0.0
    %110 = vmatprep.subr.mxu0 0.0
    %111 = vmatpush2.msra.mxu0 0.0
    %112 = vmatprep.subr.mxu0 0.0
    %113 = vmatpush2.msra.mxu0 0.0
    %114 = vmatprep.subr.mxu0 0.0
    %115 = vmatpush2.msra.mxu0 0.0
    %116 = vmatprep.subr.mxu0 0.0
    %117 = vmatpush2.msra.mxu0 0.0
    %118 = vmatprep.subr.mxu0 0.0
    %119 = vmatpush2.msra.mxu0 0.0
    %120 = vmatprep.subr.mxu0 0.0
    %121 = vmatpush2.msra.mxu0 0.0
    %122 = vmatprep.subr.mxu0 0.0
    %123 = vmatpush2.msra.mxu0 0.0
    %124 = vmatprep.mubr.f32.mxu0 0.0
    %v125 = vand.u32 %v27, 4294901760
    %v126 = vsub.f32 %v27, %v125
    %v127 = vand.u32 %v126, 4294901760
    %v128 = vsub.f32 %v126, %v127
    %v129 = vand.u32 %v128, 4294901760
    %130 = vmatmul.mubr.f32.gmra.mxu0 %v129
    %v131 = vpop.f32.mrf.mxu0
    %v132 = vadd.f32 0.0, %v131
    %v133 = vpop.f32.mrf.mxu0
    %134 = vdwg.mxu0
    %135 = vmatprep.subr.mxu0 0.0
    %v136 = vand.u32 %v43, 4294901760
    %v137 = vsub.f32 %v43, %v136
    %v138 = vand.u32 %v137, 4294901760
    %v139 = vsub.f32 %v137, %v138
    %v140 = vand.u32 %v139, 4294901760
    %141 = vmatpush1.msra.mxu0 %v140
    %142 = vmatprep.subr.mxu0 0.0
    %v143 = vand.u32 %v42, 4294901760
    %v144 = vsub.f32 %v42, %v143
    %v145 = vand.u32 %v144, 4294901760
    %v146 = vsub.f32 %v144, %v145
    %v147 = vand.u32 %v146, 4294901760
    %148 = vmatpush1.msra.mxu0 %v147
    %149 = vmatprep.subr.mxu0 0.0
    %v150 = vand.u32 %v41, 4294901760
    %v151 = vsub.f32 %v41, %v150
    %v152 = vand.u32 %v151, 4294901760
    %v153 = vsub.f32 %v151, %v152
    %v154 = vand.u32 %v153, 4294901760
    %155 = vmatpush1.msra.mxu0 %v154
    %156 = vmatprep.subr.mxu0 0.0
    %v157 = vand.u32 %v40, 4294901760
    %v158 = vsub.f32 %v40, %v157
    %v159 = vand.u32 %v158, 4294901760
    %v160 = vsub.f32 %v158, %v159
    %v161 = vand.u32 %v160, 4294901760
    %162 = vmatpush1.msra.mxu0 %v161
    %163 = vmatprep.subr.mxu0 0.0
    %v164 = vand.u32 %v39, 4294901760
    %v165 = vsub.f32 %v39, %v164
    %v166 = vand.u32 %v165, 4294901760
    %v167 = vsub.f32 %v165, %v166
    %v168 = vand.u32 %v167, 4294901760
    %169 = vmatpush1.msra.mxu0 %v168
    %170 = vmatprep.subr.mxu0 0.0
    %v171 = vand.u32 %v38, 4294901760
    %v172 = vsub.f32 %v38, %v171
    %v173 = vand.u32 %v172, 4294901760
    %v174 = vsub.f32 %v172, %v173
    %v175 = vand.u32 %v174, 4294901760
    %176 = vmatpush1.msra.mxu0 %v175
    %177 = vmatprep.subr.mxu0 0.0
    %v178 = vand.u32 %v37, 4294901760
    %v179 = vsub.f32 %v37, %v178
    %v180 = vand.u32 %v179, 4294901760
    %v181 = vsub.f32 %v179, %v180
    %v182 = vand.u32 %v181, 4294901760
    %183 = vmatpush1.msra.mxu0 %v182
    %184 = vmatprep.subr.mxu0 0.0
    %v185 = vand.u32 %v36, 4294901760
    %v186 = vsub.f32 %v36, %v185
    %v187 = vand.u32 %v186, 4294901760
    %v188 = vsub.f32 %v186, %v187
    %v189 = vand.u32 %v188, 4294901760
    %190 = vmatpush1.msra.mxu0 %v189
    %191 = vmatprep.subr.mxu0 0.0
    %v192 = vand.u32 %v35, 4294901760
    %v193 = vsub.f32 %v35, %v192
    %v194 = vand.u32 %v193, 4294901760
    %v195 = vsub.f32 %v193, %v194
    %v196 = vand.u32 %v195, 4294901760
    %197 = vmatpush1.msra.mxu0 %v196
    %198 = vmatprep.subr.mxu0 0.0
    %v199 = vand.u32 %v34, 4294901760
    %v200 = vsub.f32 %v34, %v199
    %v201 = vand.u32 %v200, 4294901760
    %v202 = vsub.f32 %v200, %v201
    %v203 = vand.u32 %v202, 4294901760
    %204 = vmatpush1.msra.mxu0 %v203
    %205 = vmatprep.subr.mxu0 0.0
    %v206 = vand.u32 %v33, 4294901760
    %v207 = vsub.f32 %v33, %v206
    %v208 = vand.u32 %v207, 4294901760
    %v209 = vsub.f32 %v207, %v208
    %v210 = vand.u32 %v209, 4294901760
    %211 = vmatpush1.msra.mxu0 %v210
    %212 = vmatprep.subr.mxu0 0.0
    %v213 = vand.u32 %v32, 4294901760
    %v214 = vsub.f32 %v32, %v213
    %v215 = vand.u32 %v214, 4294901760
    %v216 = vsub.f32 %v214, %v215
    %v217 = vand.u32 %v216, 4294901760
    %218 = vmatpush1.msra.mxu0 %v217
    %219 = vmatprep.subr.mxu0 0.0
    %v220 = vand.u32 %v31, 4294901760
    %v221 = vsub.f32 %v31, %v220
    %v222 = vand.u32 %v221, 4294901760
    %v223 = vsub.f32 %v221, %v222
    %v224 = vand.u32 %v223, 4294901760
    %225 = vmatpush1.msra.mxu0 %v224
    %226 = vmatprep.subr.mxu0 0.0
    %v227 = vand.u32 %v30, 4294901760
    %v228 = vsub.f32 %v30, %v227
    %v229 = vand.u32 %v228, 4294901760
    %v230 = vsub.f32 %v228, %v229
    %v231 = vand.u32 %v230, 4294901760
    %232 = vmatpush1.msra.mxu0 %v231
    %233 = vmatprep.subr.mxu0 0.0
    %v234 = vand.u32 %v29, 4294901760
    %v235 = vsub.f32 %v29, %v234
    %v236 = vand.u32 %v235, 4294901760
    %v237 = vsub.f32 %v235, %v236
    %v238 = vand.u32 %v237, 4294901760
    %239 = vmatpush1.msra.mxu0 %v238
    %240 = vmatprep.subr.mxu0 0.0
    %v241 = vand.u32 %v28, 4294901760
    %v242 = vsub.f32 %v28, %v241
    %v243 = vand.u32 %v242, 4294901760
    %v244 = vsub.f32 %v242, %v243
    %v245 = vand.u32 %v244, 4294901760
    %246 = vmatpush1.msra.mxu0 %v245
    %247 = vmatprep.subr.mxu0 0.0
    %248 = vmatpush2.msra.mxu0 0.0
    %249 = vmatprep.subr.mxu0 0.0
    %250 = vmatpush2.msra.mxu0 0.0
    %251 = vmatprep.subr.mxu0 0.0
    %252 = vmatpush2.msra.mxu0 0.0
    %253 = vmatprep.subr.mxu0 0.0
    %254 = vmatpush2.msra.mxu0 0.0
    %255 = vmatprep.subr.mxu0 0.0
    %256 = vmatpush2.msra.mxu0 0.0
    %257 = vmatprep.subr.mxu0 0.0
    %258 = vmatpush2.msra.mxu0 0.0
    %259 = vmatprep.subr.mxu0 0.0
    %260 = vmatpush2.msra.mxu0 0.0
    %261 = vmatprep.subr.mxu0 0.0
    %262 = vmatpush2.msra.mxu0 0.0
    %263 = vmatprep.subr.mxu0 0.0
    %264 = vmatpush2.msra.mxu0 0.0
    %265 = vmatprep.subr.mxu0 0.0
    %266 = vmatpush2.msra.mxu0 0.0
    %267 = vmatprep.subr.mxu0 0.0
    %268 = vmatpush2.msra.mxu0 0.0
    %269 = vmatprep.subr.mxu0 0.0
    %270 = vmatpush2.msra.mxu0 0.0
    %271 = vmatprep.subr.mxu0 0.0
    %272 = vmatpush2.msra.mxu0 0.0
    %273 = vmatprep.subr.mxu0 0.0
    %274 = vmatpush2.msra.mxu0 0.0
    %275 = vmatprep.subr.mxu0 0.0
    %276 = vmatpush2.msra.mxu0 0.0
    %277 = vmatprep.subr.mxu0 0.0
    %278 = vmatpush2.msra.mxu0 0.0
    %279 = vmatprep.mubr.f32.mxu0 0.0
    %v280 = vand.u32 %v27, 4294901760
    %281 = vmatmul.mubr.f32.gmra.mxu0 %v280
    %v282 = vpop.f32.mrf.mxu0
    %v283 = vadd.f32 %v132, %v282
    %v284 = vpop.f32.mrf.mxu0
    %285 = vdwg.mxu0
    %286 = vmatprep.subr.mxu0 0.0
    %v287 = vand.u32 %v43, 4294901760
    %v288 = vsub.f32 %v43, %v287
    %289 = vmatpush1.msra.mxu0 %v288
    %290 = vmatprep.subr.mxu0 0.0
    %v291 = vand.u32 %v42, 4294901760
    %v292 = vsub.f32 %v42, %v291
    %293 = vmatpush1.msra.mxu0 %v292
    %294 = vmatprep.subr.mxu0 0.0
    %v295 = vand.u32 %v41, 4294901760
    %v296 = vsub.f32 %v41, %v295
    %297 = vmatpush1.msra.mxu0 %v296
    %298 = vmatprep.subr.mxu0 0.0
    %v299 = vand.u32 %v40, 4294901760
    %v300 = vsub.f32 %v40, %v299
    %301 = vmatpush1.msra.mxu0 %v300
    %302 = vmatprep.subr.mxu0 0.0
    %v303 = vand.u32 %v39, 4294901760
    %v304 = vsub.f32 %v39, %v303
    %305 = vmatpush1.msra.mxu0 %v304
    %306 = vmatprep.subr.mxu0 0.0
    %v307 = vand.u32 %v38, 4294901760
    %v308 = vsub.f32 %v38, %v307
    %309 = vmatpush1.msra.mxu0 %v308
    %310 = vmatprep.subr.mxu0 0.0
    %v311 = vand.u32 %v37, 4294901760
    %v312 = vsub.f32 %v37, %v311
    %313 = vmatpush1.msra.mxu0 %v312
    %314 = vmatprep.subr.mxu0 0.0
    %v315 = vand.u32 %v36, 4294901760
    %v316 = vsub.f32 %v36, %v315
    %317 = vmatpush1.msra.mxu0 %v316
    %318 = vmatprep.subr.mxu0 0.0
    %v319 = vand.u32 %v35, 4294901760
    %v320 = vsub.f32 %v35, %v319
    %321 = vmatpush1.msra.mxu0 %v320
    %322 = vmatprep.subr.mxu0 0.0
    %v323 = vand.u32 %v34, 4294901760
    %v324 = vsub.f32 %v34, %v323
    %325 = vmatpush1.msra.mxu0 %v324
    %326 = vmatprep.subr.mxu0 0.0
    %v327 = vand.u32 %v33, 4294901760
    %v328 = vsub.f32 %v33, %v327
    %329 = vmatpush1.msra.mxu0 %v328
    %330 = vmatprep.subr.mxu0 0.0
    %v331 = vand.u32 %v32, 4294901760
    %v332 = vsub.f32 %v32, %v331
    %333 = vmatpush1.msra.mxu0 %v332
    %334 = vmatprep.subr.mxu0 0.0
    %v335 = vand.u32 %v31, 4294901760
    %v336 = vsub.f32 %v31, %v335
    %337 = vmatpush1.msra.mxu0 %v336
    %338 = vmatprep.subr.mxu0 0.0
    %v339 = vand.u32 %v30, 4294901760
    %v340 = vsub.f32 %v30, %v339
    %341 = vmatpush1.msra.mxu0 %v340
    %342 = vmatprep.subr.mxu0 0.0
    %v343 = vand.u32 %v29, 4294901760
    %v344 = vsub.f32 %v29, %v343
    %345 = vmatpush1.msra.mxu0 %v344
    %346 = vmatprep.subr.mxu0 0.0
    %v347 = vand.u32 %v28, 4294901760
    %v348 = vsub.f32 %v28, %v347
    %349 = vmatpush1.msra.mxu0 %v348
    %350 = vmatprep.subr.mxu0 0.0
    %351 = vmatpush2.msra.mxu0 0.0
    %352 = vmatprep.subr.mxu0 0.0
    %353 = vmatpush2.msra.mxu0 0.0
    %354 = vmatprep.subr.mxu0 0.0
    %355 = vmatpush2.msra.mxu0 0.0
    %356 = vmatprep.subr.mxu0 0.0
    %357 = vmatpush2.msra.mxu0 0.0
    %358 = vmatprep.subr.mxu0 0.0
    %359 = vmatpush2.msra.mxu0 0.0
    %360 = vmatprep.subr.mxu0 0.0
    %361 = vmatpush2.msra.mxu0 0.0
    %362 = vmatprep.subr.mxu0 0.0
    %363 = vmatpush2.msra.mxu0 0.0
    %364 = vmatprep.subr.mxu0 0.0
    %365 = vmatpush2.msra.mxu0 0.0
    %366 = vmatprep.subr.mxu0 0.0
    %367 = vmatpush2.msra.mxu0 0.0
    %368 = vmatprep.subr.mxu0 0.0
    %369 = vmatpush2.msra.mxu0 0.0
    %370 = vmatprep.subr.mxu0 0.0
    %371 = vmatpush2.msra.mxu0 0.0
    %372 = vmatprep.subr.mxu0 0.0
    %373 = vmatpush2.msra.mxu0 0.0
    %374 = vmatprep.subr.mxu0 0.0
    %375 = vmatpush2.msra.mxu0 0.0
    %376 = vmatprep.subr.mxu0 0.0
    %377 = vmatpush2.msra.mxu0 0.0
    %378 = vmatprep.subr.mxu0 0.0
    %379 = vmatpush2.msra.mxu0 0.0
    %380 = vmatprep.subr.mxu0 0.0
    %381 = vmatpush2.msra.mxu0 0.0
    %382 = vmatprep.mubr.f32.mxu0 0.0
    %v383 = vand.u32 %v27, 4294901760
    %v384 = vsub.f32 %v27, %v383
    %385 = vmatmul.mubr.f32.gmra.mxu0 %v384
    %v386 = vpop.f32.mrf.mxu0
    %v387 = vadd.f32 %v283, %v386
    %v388 = vpop.f32.mrf.mxu0
    %389 = vdwg.mxu0
    %390 = vmatprep.subr.mxu0 0.0
    %v391 = vand.u32 %v43, 4294901760
    %392 = vmatpush1.msra.mxu0 %v391
    %393 = vmatprep.subr.mxu0 0.0
    %v394 = vand.u32 %v42, 4294901760
    %395 = vmatpush1.msra.mxu0 %v394
    %396 = vmatprep.subr.mxu0 0.0
    %v397 = vand.u32 %v41, 4294901760
    %398 = vmatpush1.msra.mxu0 %v397
    %399 = vmatprep.subr.mxu0 0.0
    %v400 = vand.u32 %v40, 4294901760
    %401 = vmatpush1.msra.mxu0 %v400
    %402 = vmatprep.subr.mxu0 0.0
    %v403 = vand.u32 %v39, 4294901760
    %404 = vmatpush1.msra.mxu0 %v403
    %405 = vmatprep.subr.mxu0 0.0
    %v406 = vand.u32 %v38, 4294901760
    %407 = vmatpush1.msra.mxu0 %v406
    %408 = vmatprep.subr.mxu0 0.0
    %v409 = vand.u32 %v37, 4294901760
    %410 = vmatpush1.msra.mxu0 %v409
    %411 = vmatprep.subr.mxu0 0.0
    %v412 = vand.u32 %v36, 4294901760
    %413 = vmatpush1.msra.mxu0 %v412
    %414 = vmatprep.subr.mxu0 0.0
    %v415 = vand.u32 %v35, 4294901760
    %416 = vmatpush1.msra.mxu0 %v415
    %417 = vmatprep.subr.mxu0 0.0
    %v418 = vand.u32 %v34, 4294901760
    %419 = vmatpush1.msra.mxu0 %v418
    %420 = vmatprep.subr.mxu0 0.0
    %v421 = vand.u32 %v33, 4294901760
    %422 = vmatpush1.msra.mxu0 %v421
    %423 = vmatprep.subr.mxu0 0.0
    %v424 = vand.u32 %v32, 4294901760
    %425 = vmatpush1.msra.mxu0 %v424
    %426 = vmatprep.subr.mxu0 0.0
    %v427 = vand.u32 %v31, 4294901760
    %428 = vmatpush1.msra.mxu0 %v427
    %429 = vmatprep.subr.mxu0 0.0
    %v430 = vand.u32 %v30, 4294901760
    %431 = vmatpush1.msra.mxu0 %v430
    %432 = vmatprep.subr.mxu0 0.0
    %v433 = vand.u32 %v29, 4294901760
    %434 = vmatpush1.msra.mxu0 %v433
    %435 = vmatprep.subr.mxu0 0.0
    %v436 = vand.u32 %v28, 4294901760
    %437 = vmatpush1.msra.mxu0 %v436
    %438 = vmatprep.subr.mxu0 0.0
    %439 = vmatpush2.msra.mxu0 0.0
    %440 = vmatprep.subr.mxu0 0.0
    %441 = vmatpush2.msra.mxu0 0.0
    %442 = vmatprep.subr.mxu0 0.0
    %443 = vmatpush2.msra.mxu0 0.0
    %444 = vmatprep.subr.mxu0 0.0
    %445 = vmatpush2.msra.mxu0 0.0
    %446 = vmatprep.subr.mxu0 0.0
    %447 = vmatpush2.msra.mxu0 0.0
    %448 = vmatprep.subr.mxu0 0.0
    %449 = vmatpush2.msra.mxu0 0.0
    %450 = vmatprep.subr.mxu0 0.0
    %451 = vmatpush2.msra.mxu0 0.0
    %452 = vmatprep.subr.mxu0 0.0
    %453 = vmatpush2.msra.mxu0 0.0
    %454 = vmatprep.subr.mxu0 0.0
    %455 = vmatpush2.msra.mxu0 0.0
    %456 = vmatprep.subr.mxu0 0.0
    %457 = vmatpush2.msra.mxu0 0.0
    %458 = vmatprep.subr.mxu0 0.0
    %459 = vmatpush2.msra.mxu0 0.0
    %460 = vmatprep.subr.mxu0 0.0
    %461 = vmatpush2.msra.mxu0 0.0
    %462 = vmatprep.subr.mxu0 0.0
    %463 = vmatpush2.msra.mxu0 0.0
    %464 = vmatprep.subr.mxu0 0.0
    %465 = vmatpush2.msra.mxu0 0.0
    %466 = vmatprep.subr.mxu0 0.0
    %467 = vmatpush2.msra.mxu0 0.0
    %468 = vmatprep.subr.mxu0 0.0
    %469 = vmatpush2.msra.mxu0 0.0
    %470 = vmatprep.mubr.f32.mxu0 0.0
    %v471 = vand.u32 %v27, 4294901760
    %v472 = vsub.f32 %v27, %v471
    %v473 = vand.u32 %v472, 4294901760
    %474 = vmatmul.mubr.f32.gmra.mxu0 %v473
    %v475 = vpop.f32.mrf.mxu0
    %v476 = vadd.f32 %v387, %v475
    %v477 = vpop.f32.mrf.mxu0
    %478 = vdwg.mxu0
    %479 = vmatprep.subr.mxu0 0.0
    %v480 = vand.u32 %v43, 4294901760
    %v481 = vsub.f32 %v43, %v480
    %v482 = vand.u32 %v481, 4294901760
    %483 = vmatpush1.msra.mxu0 %v482
    %484 = vmatprep.subr.mxu0 0.0
    %v485 = vand.u32 %v42, 4294901760
    %v486 = vsub.f32 %v42, %v485
    %v487 = vand.u32 %v486, 4294901760
    %488 = vmatpush1.msra.mxu0 %v487
    %489 = vmatprep.subr.mxu0 0.0
    %v490 = vand.u32 %v41, 4294901760
    %v491 = vsub.f32 %v41, %v490
    %v492 = vand.u32 %v491, 4294901760
    %493 = vmatpush1.msra.mxu0 %v492
    %494 = vmatprep.subr.mxu0 0.0
    %v495 = vand.u32 %v40, 4294901760
    %v496 = vsub.f32 %v40, %v495
    %v497 = vand.u32 %v496, 4294901760
    %498 = vmatpush1.msra.mxu0 %v497
    %499 = vmatprep.subr.mxu0 0.0
    %v500 = vand.u32 %v39, 4294901760
    %v501 = vsub.f32 %v39, %v500
    %v502 = vand.u32 %v501, 4294901760
    %503 = vmatpush1.msra.mxu0 %v502
    %504 = vmatprep.subr.mxu0 0.0
    %v505 = vand.u32 %v38, 4294901760
    %v506 = vsub.f32 %v38, %v505
    %v507 = vand.u32 %v506, 4294901760
    %508 = vmatpush1.msra.mxu0 %v507
    %509 = vmatprep.subr.mxu0 0.0
    %v510 = vand.u32 %v37, 4294901760
    %v511 = vsub.f32 %v37, %v510
    %v512 = vand.u32 %v511, 4294901760
    %513 = vmatpush1.msra.mxu0 %v512
    %514 = vmatprep.subr.mxu0 0.0
    %v515 = vand.u32 %v36, 4294901760
    %v516 = vsub.f32 %v36, %v515
    %v517 = vand.u32 %v516, 4294901760
    %518 = vmatpush1.msra.mxu0 %v517
    %519 = vmatprep.subr.mxu0 0.0
    %v520 = vand.u32 %v35, 4294901760
    %v521 = vsub.f32 %v35, %v520
    %v522 = vand.u32 %v521, 4294901760
    %523 = vmatpush1.msra.mxu0 %v522
    %524 = vmatprep.subr.mxu0 0.0
    %v525 = vand.u32 %v34, 4294901760
    %v526 = vsub.f32 %v34, %v525
    %v527 = vand.u32 %v526, 4294901760
    %528 = vmatpush1.msra.mxu0 %v527
    %529 = vmatprep.subr.mxu0 0.0
    %v530 = vand.u32 %v33, 4294901760
    %v531 = vsub.f32 %v33, %v530
    %v532 = vand.u32 %v531, 4294901760
    %533 = vmatpush1.msra.mxu0 %v532
    %534 = vmatprep.subr.mxu0 0.0
    %v535 = vand.u32 %v32, 4294901760
    %v536 = vsub.f32 %v32, %v535
    %v537 = vand.u32 %v536, 4294901760
    %538 = vmatpush1.msra.mxu0 %v537
    %539 = vmatprep.subr.mxu0 0.0
    %v540 = vand.u32 %v31, 4294901760
    %v541 = vsub.f32 %v31, %v540
    %v542 = vand.u32 %v541, 4294901760
    %543 = vmatpush1.msra.mxu0 %v542
    %544 = vmatprep.subr.mxu0 0.0
    %v545 = vand.u32 %v30, 4294901760
    %v546 = vsub.f32 %v30, %v545
    %v547 = vand.u32 %v546, 4294901760
    %548 = vmatpush1.msra.mxu0 %v547
    %549 = vmatprep.subr.mxu0 0.0
    %v550 = vand.u32 %v29, 4294901760
    %v551 = vsub.f32 %v29, %v550
    %v552 = vand.u32 %v551, 4294901760
    %553 = vmatpush1.msra.mxu0 %v552
    %554 = vmatprep.subr.mxu0 0.0
    %v555 = vand.u32 %v28, 4294901760
    %v556 = vsub.f32 %v28, %v555
    %v557 = vand.u32 %v556, 4294901760
    %558 = vmatpush1.msra.mxu0 %v557
    %559 = vmatprep.subr.mxu0 0.0
    %560 = vmatpush2.msra.mxu0 0.0
    %561 = vmatprep.subr.mxu0 0.0
    %562 = vmatpush2.msra.mxu0 0.0
    %563 = vmatprep.subr.mxu0 0.0
    %564 = vmatpush2.msra.mxu0 0.0
    %565 = vmatprep.subr.mxu0 0.0
    %566 = vmatpush2.msra.mxu0 0.0
    %567 = vmatprep.subr.mxu0 0.0
    %568 = vmatpush2.msra.mxu0 0.0
    %569 = vmatprep.subr.mxu0 0.0
    %570 = vmatpush2.msra.mxu0 0.0
    %571 = vmatprep.subr.mxu0 0.0
    %572 = vmatpush2.msra.mxu0 0.0
    %573 = vmatprep.subr.mxu0 0.0
    %574 = vmatpush2.msra.mxu0 0.0
    %575 = vmatprep.subr.mxu0 0.0
    %576 = vmatpush2.msra.mxu0 0.0
    %577 = vmatprep.subr.mxu0 0.0
    %578 = vmatpush2.msra.mxu0 0.0
    %579 = vmatprep.subr.mxu0 0.0
    %580 = vmatpush2.msra.mxu0 0.0
    %581 = vmatprep.subr.mxu0 0.0
    %582 = vmatpush2.msra.mxu0 0.0
    %583 = vmatprep.subr.mxu0 0.0
    %584 = vmatpush2.msra.mxu0 0.0
    %585 = vmatprep.subr.mxu0 0.0
    %586 = vmatpush2.msra.mxu0 0.0
    %587 = vmatprep.subr.mxu0 0.0
    %588 = vmatpush2.msra.mxu0 0.0
    %589 = vmatprep.subr.mxu0 0.0
    %590 = vmatpush2.msra.mxu0 0.0
    %591 = vmatprep.mubr.f32.mxu0 0.0
    %v592 = vand.u32 %v27, 4294901760
    %593 = vmatmul.mubr.f32.gmra.mxu0 %v592
    %v594 = vpop.f32.mrf.mxu0
    %v595 = vadd.f32 %v476, %v594
    %v596 = vpop.f32.mrf.mxu0
    %597 = vdwg.mxu0
    %598 = vmatprep.subr.mxu0 0.0
    %v599 = vand.u32 %v43, 4294901760
    %600 = vmatpush1.msra.mxu0 %v599
    %601 = vmatprep.subr.mxu0 0.0
    %v602 = vand.u32 %v42, 4294901760
    %603 = vmatpush1.msra.mxu0 %v602
    %604 = vmatprep.subr.mxu0 0.0
    %v605 = vand.u32 %v41, 4294901760
    %606 = vmatpush1.msra.mxu0 %v605
    %607 = vmatprep.subr.mxu0 0.0
    %v608 = vand.u32 %v40, 4294901760
    %609 = vmatpush1.msra.mxu0 %v608
    %610 = vmatprep.subr.mxu0 0.0
    %v611 = vand.u32 %v39, 4294901760
    %612 = vmatpush1.msra.mxu0 %v611
    %613 = vmatprep.subr.mxu0 0.0
    %v614 = vand.u32 %v38, 4294901760
    %615 = vmatpush1.msra.mxu0 %v614
    %616 = vmatprep.subr.mxu0 0.0
    %v617 = vand.u32 %v37, 4294901760
    %618 = vmatpush1.msra.mxu0 %v617
    %619 = vmatprep.subr.mxu0 0.0
    %v620 = vand.u32 %v36, 4294901760
    %621 = vmatpush1.msra.mxu0 %v620
    %622 = vmatprep.subr.mxu0 0.0
    %v623 = vand.u32 %v35, 4294901760
    %624 = vmatpush1.msra.mxu0 %v623
    %625 = vmatprep.subr.mxu0 0.0
    %v626 = vand.u32 %v34, 4294901760
    %627 = vmatpush1.msra.mxu0 %v626
    %628 = vmatprep.subr.mxu0 0.0
    %v629 = vand.u32 %v33, 4294901760
    %630 = vmatpush1.msra.mxu0 %v629
    %631 = vmatprep.subr.mxu0 0.0
    %v632 = vand.u32 %v32, 4294901760
    %633 = vmatpush1.msra.mxu0 %v632
    %634 = vmatprep.subr.mxu0 0.0
    %v635 = vand.u32 %v31, 4294901760
    %636 = vmatpush1.msra.mxu0 %v635
    %637 = vmatprep.subr.mxu0 0.0
    %v638 = vand.u32 %v30, 4294901760
    %639 = vmatpush1.msra.mxu0 %v638
    %640 = vmatprep.subr.mxu0 0.0
    %v641 = vand.u32 %v29, 4294901760
    %642 = vmatpush1.msra.mxu0 %v641
    %643 = vmatprep.subr.mxu0 0.0
    %v644 = vand.u32 %v28, 4294901760
    %645 = vmatpush1.msra.mxu0 %v644
    %646 = vmatprep.subr.mxu0 0.0
    %647 = vmatpush2.msra.mxu0 0.0
    %648 = vmatprep.subr.mxu0 0.0
    %649 = vmatpush2.msra.mxu0 0.0
    %650 = vmatprep.subr.mxu0 0.0
    %651 = vmatpush2.msra.mxu0 0.0
    %652 = vmatprep.subr.mxu0 0.0
    %653 = vmatpush2.msra.mxu0 0.0
    %654 = vmatprep.subr.mxu0 0.0
    %655 = vmatpush2.msra.mxu0 0.0
    %656 = vmatprep.subr.mxu0 0.0
    %657 = vmatpush2.msra.mxu0 0.0
    %658 = vmatprep.subr.mxu0 0.0
    %659 = vmatpush2.msra.mxu0 0.0
    %660 = vmatprep.subr.mxu0 0.0
    %661 = vmatpush2.msra.mxu0 0.0
    %662 = vmatprep.subr.mxu0 0.0
    %663 = vmatpush2.msra.mxu0 0.0
    %664 = vmatprep.subr.mxu0 0.0
    %665 = vmatpush2.msra.mxu0 0.0
    %666 = vmatprep.subr.mxu0 0.0
    %667 = vmatpush2.msra.mxu0 0.0
    %668 = vmatprep.subr.mxu0 0.0
    %669 = vmatpush2.msra.mxu0 0.0
    %670 = vmatprep.subr.mxu0 0.0
    %671 = vmatpush2.msra.mxu0 0.0
    %672 = vmatprep.subr.mxu0 0.0
    %673 = vmatpush2.msra.mxu0 0.0
    %674 = vmatprep.subr.mxu0 0.0
    %675 = vmatpush2.msra.mxu0 0.0
    %676 = vmatprep.subr.mxu0 0.0
    %677 = vmatpush2.msra.mxu0 0.0
    %678 = vmatprep.mubr.f32.mxu0 0.0
    %v679 = vand.u32 %v27, 4294901760
    %680 = vmatmul.mubr.f32.gmra.mxu0 %v679
    %v681 = vpop.f32.mrf.mxu0
    %v682 = vadd.f32 %v595, %v681
    %v683 = vpop.f32.mrf.mxu0
    %684 = vdwg.mxu0
    %v685 = vtanh.pop %v682
    %vm686 = vcmask 113768
    %687 = vst.msk [vmem:[%s2] sm:$0xff] %vm686, %v685
    %v688 = vmax.f32 %v682, 0.0
    %vm689 = vcmask 121968
    %690 = vst.msk [vmem:[%s2] sm:$0xff] %vm689, %v688
    %v691 = vxor.u32 %v682, 2147483648
    %v692 = vmul.f32 %v691, 1.442695
    %v693 = vpow.pop %v692
    %v694 = vadd.f32 %v693, 1.0
    %v695 = vrcp.pop %v694
    %v696 = vmul.f32 1.0, %v695
    %vm697 = vcmask 130168
    %698 = vst.msk [vmem:[%s2] sm:$0xff] %vm697, %v696
    %v699 = vld [vmem:[%s2] sm:$0xff]
    %v700 = vld [vmem:[#allocation2] sm:$0xff]
    %v701 = vld [vmem:[#allocation2 + $0x8] sm:$0xff]
    %v702 = vld [vmem:[#allocation2 + $0x10] sm:$0xff]
    %v703 = vld [vmem:[#allocation2 + $0x18] sm:$0xff]
    %v704 = vld [vmem:[#allocation2 + $0x20] sm:$0xff]
    %v705 = vld [vmem:[#allocation2 + $0x28] sm:$0xff]
    %v706 = vld [vmem:[#allocation2 + $0x30] sm:$0xff]
    %v707 = vld [vmem:[#allocation2 + $0x38] sm:$0xff]
    %v708 = vld [vmem:[#allocation2 + $0x40] sm:$0xff]
    %v709 = vld [vmem:[#allocation2 + $0x48] sm:$0xff]
    %v710 = vld [vmem:[#allocation2 + $0x50] sm:$0xff]
    %v711 = vld [vmem:[#allocation2 + $0x58] sm:$0xff]
    %v712 = vld [vmem:[#allocation2 + $0x60] sm:$0xff]
    %v713 = vld [vmem:[#allocation2 + $0x68] sm:$0xff]
    %v714 = vld [vmem:[#allocation2 + $0x70] sm:$0xff]
    %v715 = vld [vmem:[#allocation2 + $0x78] sm:$0xff]
    %716 = vmatprep.subr.mxu0 0.0
    %v717 = vand.u32 %v715, 4294901760
    %718 = vmatpush1.msra.mxu0 %v717
    %719 = vmatprep.subr.mxu0 0.0
    %v720 = vand.u32 %v714, 4294901760
    %721 = vmatpush1.msra.mxu0 %v720
    %722 = vmatprep.subr.mxu0 0.0
    %v723 = vand.u32 %v713, 4294901760
    %724 = vmatpush1.msra.mxu0 %v723
    %725 = vmatprep.subr.mxu0 0.0
    %v726 = vand.u32 %v712, 4294901760
    %727 = vmatpush1.msra.mxu0 %v726
    %728 = vmatprep.subr.mxu0 0.0
    %v729 = vand.u32 %v711, 4294901760
    %730 = vmatpush1.msra.mxu0 %v729
    %731 = vmatprep.subr.mxu0 0.0
    %v732 = vand.u32 %v710, 4294901760
    %733 = vmatpush1.msra.mxu0 %v732
    %734 = vmatprep.subr.mxu0 0.0
    %v735 = vand.u32 %v709, 4294901760
    %736 = vmatpush1.msra.mxu0 %v735
    %737 = vmatprep.subr.mxu0 0.0
    %v738 = vand.u32 %v708, 4294901760
    %739 = vmatpush1.msra.mxu0 %v738
    %740 = vmatprep.subr.mxu0 0.0
    %v741 = vand.u32 %v707, 4294901760
    %742 = vmatpush1.msra.mxu0 %v741
    %743 = vmatprep.subr.mxu0 0.0
    %v744 = vand.u32 %v706, 4294901760
    %745 = vmatpush1.msra.mxu0 %v744
    %746 = vmatprep.subr.mxu0 0.0
    %v747 = vand.u32 %v705, 4294901760
    %748 = vmatpush1.msra.mxu0 %v747
    %749 = vmatprep.subr.mxu0 0.0
    %v750 = vand.u32 %v704, 4294901760
    %751 = vmatpush1.msra.mxu0 %v750
    %752 = vmatprep.subr.mxu0 0.0
    %v753 = vand.u32 %v703, 4294901760
    %754 = vmatpush1.msra.mxu0 %v753
    %755 = vmatprep.subr.mxu0 0.0
    %v756 = vand.u32 %v702, 4294901760
    %757 = vmatpush1.msra.mxu0 %v756
    %758 = vmatprep.subr.mxu0 0.0
    %v759 = vand.u32 %v701, 4294901760
    %760 = vmatpush1.msra.mxu0 %v759
    %761 = vmatprep.subr.mxu0 0.0
    %v762 = vand.u32 %v700, 4294901760
    %763 = vmatpush1.msra.mxu0 %v762
    %764 = vmatprep.subr.mxu0 0.0
    %765 = vmatpush2.msra.mxu0 0.0
    %766 = vmatprep.subr.mxu0 0.0
    %767 = vmatpush2.msra.mxu0 0.0
    %768 = vmatprep.subr.mxu0 0.0
    %769 = vmatpush2.msra.mxu0 0.0
    %770 = vmatprep.subr.mxu0 0.0
    %771 = vmatpush2.msra.mxu0 0.0
    %772 = vmatprep.subr.mxu0 0.0
    %773 = vmatpush2.msra.mxu0 0.0
    %774 = vmatprep.subr.mxu0 0.0
    %775 = vmatpush2.msra.mxu0 0.0
    %776 = vmatprep.subr.mxu0 0.0
    %777 = vmatpush2.msra.mxu0 0.0
    %778 = vmatprep.subr.mxu0 0.0
    %779 = vmatpush2.msra.mxu0 0.0
    %780 = vmatprep.subr.mxu0 0.0
    %781 = vmatpush2.msra.mxu0 0.0
    %782 = vmatprep.subr.mxu0 0.0
    %783 = vmatpush2.msra.mxu0 0.0
    %784 = vmatprep.subr.mxu0 0.0
    %785 = vmatpush2.msra.mxu0 0.0
    %786 = vmatprep.subr.mxu0 0.0
    %787 = vmatpush2.msra.mxu0 0.0
    %788 = vmatprep.subr.mxu0 0.0
    %789 = vmatpush2.msra.mxu0 0.0
    %790 = vmatprep.subr.mxu0 0.0
    %791 = vmatpush2.msra.mxu0 0.0
    %792 = vmatprep.subr.mxu0 0.0
    %793 = vmatpush2.msra.mxu0 0.0
    %794 = vmatprep.subr.mxu0 0.0
    %795 = vmatpush2.msra.mxu0 0.0
    %796 = vmatprep.mubr.f32.mxu0 0.0
    %v797 = vand.u32 %v699, 4294901760
    %v798 = vsub.f32 %v699, %v797
    %v799 = vand.u32 %v798, 4294901760
    %v800 = vsub.f32 %v798, %v799
    %v801 = vand.u32 %v800, 4294901760
    %802 = vmatmul.mubr.f32.gmra.mxu0 %v801
    %v803 = vpop.f32.mrf.mxu0
    %v804 = vadd.f32 0.0, %v803
    %v805 = vpop.f32.mrf.mxu0
    %806 = vdwg.mxu0
    %807 = vmatprep.subr.mxu0 0.0
    %v808 = vand.u32 %v715, 4294901760
    %v809 = vsub.f32 %v715, %v808
    %v810 = vand.u32 %v809, 4294901760
    %v811 = vsub.f32 %v809, %v810
    %v812 = vand.u32 %v811, 4294901760
    %813 = vmatpush1.msra.mxu0 %v812
    %814 = vmatprep.subr.mxu0 0.0
    %v815 = vand.u32 %v714, 4294901760
    %v816 = vsub.f32 %v714, %v815
    %v817 = vand.u32 %v816, 4294901760
    %v818 = vsub.f32 %v816, %v817
    %v819 = vand.u32 %v818, 4294901760
    %820 = vmatpush1.msra.mxu0 %v819
    %821 = vmatprep.subr.mxu0 0.0
    %v822 = vand.u32 %v713, 4294901760
    %v823 = vsub.f32 %v713, %v822
    %v824 = vand.u32 %v823, 4294901760
    %v825 = vsub.f32 %v823, %v824
    %v826 = vand.u32 %v825, 4294901760
    %827 = vmatpush1.msra.mxu0 %v826
    %828 = vmatprep.subr.mxu0 0.0
    %v829 = vand.u32 %v712, 4294901760
    %v830 = vsub.f32 %v712, %v829
    %v831 = vand.u32 %v830, 4294901760
    %v832 = vsub.f32 %v830, %v831
    %v833 = vand.u32 %v832, 4294901760
    %834 = vmatpush1.msra.mxu0 %v833
    %835 = vmatprep.subr.mxu0 0.0
    %v836 = vand.u32 %v711, 4294901760
    %v837 = vsub.f32 %v711, %v836
    %v838 = vand.u32 %v837, 4294901760
    %v839 = vsub.f32 %v837, %v838
    %v840 = vand.u32 %v839, 4294901760
    %841 = vmatpush1.msra.mxu0 %v840
    %842 = vmatprep.subr.mxu0 0.0
    %v843 = vand.u32 %v710, 4294901760
    %v844 = vsub.f32 %v710, %v843
    %v845 = vand.u32 %v844, 4294901760
    %v846 = vsub.f32 %v844, %v845
    %v847 = vand.u32 %v846, 4294901760
    %848 = vmatpush1.msra.mxu0 %v847
    %849 = vmatprep.subr.mxu0 0.0
    %v850 = vand.u32 %v709, 4294901760
    %v851 = vsub.f32 %v709, %v850
    %v852 = vand.u32 %v851, 4294901760
    %v853 = vsub.f32 %v851, %v852
    %v854 = vand.u32 %v853, 4294901760
    %855 = vmatpush1.msra.mxu0 %v854
    %856 = vmatprep.subr.mxu0 0.0
    %v857 = vand.u32 %v708, 4294901760
    %v858 = vsub.f32 %v708, %v857
    %v859 = vand.u32 %v858, 4294901760
    %v860 = vsub.f32 %v858, %v859
    %v861 = vand.u32 %v860, 4294901760
    %862 = vmatpush1.msra.mxu0 %v861
    %863 = vmatprep.subr.mxu0 0.0
    %v864 = vand.u32 %v707, 4294901760
    %v865 = vsub.f32 %v707, %v864
    %v866 = vand.u32 %v865, 4294901760
    %v867 = vsub.f32 %v865, %v866
    %v868 = vand.u32 %v867, 4294901760
    %869 = vmatpush1.msra.mxu0 %v868
    %870 = vmatprep.subr.mxu0 0.0
    %v871 = vand.u32 %v706, 4294901760
    %v872 = vsub.f32 %v706, %v871
    %v873 = vand.u32 %v872, 4294901760
    %v874 = vsub.f32 %v872, %v873
    %v875 = vand.u32 %v874, 4294901760
    %876 = vmatpush1.msra.mxu0 %v875
    %877 = vmatprep.subr.mxu0 0.0
    %v878 = vand.u32 %v705, 4294901760
    %v879 = vsub.f32 %v705, %v878
    %v880 = vand.u32 %v879, 4294901760
    %v881 = vsub.f32 %v879, %v880
    %v882 = vand.u32 %v881, 4294901760
    %883 = vmatpush1.msra.mxu0 %v882
    %884 = vmatprep.subr.mxu0 0.0
    %v885 = vand.u32 %v704, 4294901760
    %v886 = vsub.f32 %v704, %v885
    %v887 = vand.u32 %v886, 4294901760
    %v888 = vsub.f32 %v886, %v887
    %v889 = vand.u32 %v888, 4294901760
    %890 = vmatpush1.msra.mxu0 %v889
    %891 = vmatprep.subr.mxu0 0.0
    %v892 = vand.u32 %v703, 4294901760
    %v893 = vsub.f32 %v703, %v892
    %v894 = vand.u32 %v893, 4294901760
    %v895 = vsub.f32 %v893, %v894
    %v896 = vand.u32 %v895, 4294901760
    %897 = vmatpush1.msra.mxu0 %v896
    %898 = vmatprep.subr.mxu0 0.0
    %v899 = vand.u32 %v702, 4294901760
    %v900 = vsub.f32 %v702, %v899
    %v901 = vand.u32 %v900, 4294901760
    %v902 = vsub.f32 %v900, %v901
    %v903 = vand.u32 %v902, 4294901760
    %904 = vmatpush1.msra.mxu0 %v903
    %905 = vmatprep.subr.mxu0 0.0
    %v906 = vand.u32 %v701, 4294901760
    %v907 = vsub.f32 %v701, %v906
    %v908 = vand.u32 %v907, 4294901760
    %v909 = vsub.f32 %v907, %v908
    %v910 = vand.u32 %v909, 4294901760
    %911 = vmatpush1.msra.mxu0 %v910
    %912 = vmatprep.subr.mxu0 0.0
    %v913 = vand.u32 %v700, 4294901760
    %v914 = vsub.f32 %v700, %v913
    %v915 = vand.u32 %v914, 4294901760
    %v916 = vsub.f32 %v914, %v915
    %v917 = vand.u32 %v916, 4294901760
    %918 = vmatpush1.msra.mxu0 %v917
    %919 = vmatprep.subr.mxu0 0.0
    %920 = vmatpush2.msra.mxu0 0.0
    %921 = vmatprep.subr.mxu0 0.0
    %922 = vmatpush2.msra.mxu0 0.0
    %923 = vmatprep.subr.mxu0 0.0
    %924 = vmatpush2.msra.mxu0 0.0
    %925 = vmatprep.subr.mxu0 0.0
    %926 = vmatpush2.msra.mxu0 0.0
    %927 = vmatprep.subr.mxu0 0.0
    %928 = vmatpush2.msra.mxu0 0.0
    %929 = vmatprep.subr.mxu0 0.0
    %930 = vmatpush2.msra.mxu0 0.0
    %931 = vmatprep.subr.mxu0 0.0
    %932 = vmatpush2.msra.mxu0 0.0
    %933 = vmatprep.subr.mxu0 0.0
    %934 = vmatpush2.msra.mxu0 0.0
    %935 = vmatprep.subr.mxu0 0.0
    %936 = vmatpush2.msra.mxu0 0.0
    %937 = vmatprep.subr.mxu0 0.0
    %938 = vmatpush2.msra.mxu0 0.0
    %939 = vmatprep.subr.mxu0 0.0
    %940 = vmatpush2.msra.mxu0 0.0
    %941 = vmatprep.subr.mxu0 0.0
    %942 = vmatpush2.msra.mxu0 0.0
    %943 = vmatprep.subr.mxu0 0.0
    %944 = vmatpush2.msra.mxu0 0.0
    %945 = vmatprep.subr.mxu0 0.0
    %946 = vmatpush2.msra.mxu0 0.0
    %947 = vmatprep.subr.mxu0 0.0
    %948 = vmatpush2.msra.mxu0 0.0
    %949 = vmatprep.subr.mxu0 0.0
    %950 = vmatpush2.msra.mxu0 0.0
    %951 = vmatprep.mubr.f32.mxu0 0.0
    %v952 = vand.u32 %v699, 4294901760
    %953 = vmatmul.mubr.f32.gmra.mxu0 %v952
    %v954 = vpop.f32.mrf.mxu0
    %v955 = vadd.f32 %v804, %v954
    %v956 = vpop.f32.mrf.mxu0
    %957 = vdwg.mxu0
    %958 = vmatprep.subr.mxu0 0.0
    %v959 = vand.u32 %v715, 4294901760
    %v960 = vsub.f32 %v715, %v959
    %961 = vmatpush1.msra.mxu0 %v960
    %962 = vmatprep.subr.mxu0 0.0
    %v963 = vand.u32 %v714, 4294901760
    %v964 = vsub.f32 %v714, %v963
    %965 = vmatpush1.msra.mxu0 %v964
    %966 = vmatprep.subr.mxu0 0.0
    %v967 = vand.u32 %v713, 4294901760
    %v968 = vsub.f32 %v713, %v967
    %969 = vmatpush1.msra.mxu0 %v968
    %970 = vmatprep.subr.mxu0 0.0
    %v971 = vand.u32 %v712, 4294901760
    %v972 = vsub.f32 %v712, %v971
    %973 = vmatpush1.msra.mxu0 %v972
    %974 = vmatprep.subr.mxu0 0.0
    %v975 = vand.u32 %v711, 4294901760
    %v976 = vsub.f32 %v711, %v975
    %977 = vmatpush1.msra.mxu0 %v976
    %978 = vmatprep.subr.mxu0 0.0
    %v979 = vand.u32 %v710, 4294901760
    %v980 = vsub.f32 %v710, %v979
    %981 = vmatpush1.msra.mxu0 %v980
    %982 = vmatprep.subr.mxu0 0.0
    %v983 = vand.u32 %v709, 4294901760
    %v984 = vsub.f32 %v709, %v983
    %985 = vmatpush1.msra.mxu0 %v984
    %986 = vmatprep.subr.mxu0 0.0
    %v987 = vand.u32 %v708, 4294901760
    %v988 = vsub.f32 %v708, %v987
    %989 = vmatpush1.msra.mxu0 %v988
    %990 = vmatprep.subr.mxu0 0.0
    %v991 = vand.u32 %v707, 4294901760
    %v992 = vsub.f32 %v707, %v991
    %993 = vmatpush1.msra.mxu0 %v992
    %994 = vmatprep.subr.mxu0 0.0
    %v995 = vand.u32 %v706, 4294901760
    %v996 = vsub.f32 %v706, %v995
    %997 = vmatpush1.msra.mxu0 %v996
    %998 = vmatprep.subr.mxu0 0.0
    %v999 = vand.u32 %v705, 4294901760
    %v1000 = vsub.f32 %v705, %v999
    %1001 = vmatpush1.msra.mxu0 %v1000
    %1002 = vmatprep.subr.mxu0 0.0
    %v1003 = vand.u32 %v704, 4294901760
    %v1004 = vsub.f32 %v704, %v1003
    %1005 = vmatpush1.msra.mxu0 %v1004
    %1006 = vmatprep.subr.mxu0 0.0
    %v1007 = vand.u32 %v703, 4294901760
    %v1008 = vsub.f32 %v703, %v1007
    %1009 = vmatpush1.msra.mxu0 %v1008
    %1010 = vmatprep.subr.mxu0 0.0
    %v1011 = vand.u32 %v702, 4294901760
    %v1012 = vsub.f32 %v702, %v1011
    %1013 = vmatpush1.msra.mxu0 %v1012
    %1014 = vmatprep.subr.mxu0 0.0
    %v1015 = vand.u32 %v701, 4294901760
    %v1016 = vsub.f32 %v701, %v1015
    %1017 = vmatpush1.msra.mxu0 %v1016
    %1018 = vmatprep.subr.mxu0 0.0
    %v1019 = vand.u32 %v700, 4294901760
    %v1020 = vsub.f32 %v700, %v1019
    %1021 = vmatpush1.msra.mxu0 %v1020
    %1022 = vmatprep.subr.mxu0 0.0
    %1023 = vmatpush2.msra.mxu0 0.0
    %1024 = vmatprep.subr.mxu0 0.0
    %1025 = vmatpush2.msra.mxu0 0.0
    %1026 = vmatprep.subr.mxu0 0.0
    %1027 = vmatpush2.msra.mxu0 0.0
    %1028 = vmatprep.subr.mxu0 0.0
    %1029 = vmatpush2.msra.mxu0 0.0
    %1030 = vmatprep.subr.mxu0 0.0
    %1031 = vmatpush2.msra.mxu0 0.0
    %1032 = vmatprep.subr.mxu0 0.0
    %1033 = vmatpush2.msra.mxu0 0.0
    %1034 = vmatprep.subr.mxu0 0.0
    %1035 = vmatpush2.msra.mxu0 0.0
    %1036 = vmatprep.subr.mxu0 0.0
    %1037 = vmatpush2.msra.mxu0 0.0
    %1038 = vmatprep.subr.mxu0 0.0
    %1039 = vmatpush2.msra.mxu0 0.0
    %1040 = vmatprep.subr.mxu0 0.0
    %1041 = vmatpush2.msra.mxu0 0.0
    %1042 = vmatprep.subr.mxu0 0.0
    %1043 = vmatpush2.msra.mxu0 0.0
    %1044 = vmatprep.subr.mxu0 0.0
    %1045 = vmatpush2.msra.mxu0 0.0
    %1046 = vmatprep.subr.mxu0 0.0
    %1047 = vmatpush2.msra.mxu0 0.0
    %1048 = vmatprep.subr.mxu0 0.0
    %1049 = vmatpush2.msra.mxu0 0.0
    %1050 = vmatprep.subr.mxu0 0.0
    %1051 = vmatpush2.msra.mxu0 0.0
    %1052 = vmatprep.subr.mxu0 0.0
    %1053 = vmatpush2.msra.mxu0 0.0
    %1054 = vmatprep.mubr.f32.mxu0 0.0
    %v1055 = vand.u32 %v699, 4294901760
    %v1056 = vsub.f32 %v699, %v1055
    %1057 = vmatmul.mubr.f32.gmra.mxu0 %v1056
    %v1058 = vpop.f32.mrf.mxu0
    %v1059 = vadd.f32 %v955, %v1058
    %v1060 = vpop.f32.mrf.mxu0
    %1061 = vdwg.mxu0
    %1062 = vmatprep.subr.mxu0 0.0
    %v1063 = vand.u32 %v715, 4294901760
    %1064 = vmatpush1.msra.mxu0 %v1063
    %1065 = vmatprep.subr.mxu0 0.0
    %v1066 = vand.u32 %v714, 4294901760
    %1067 = vmatpush1.msra.mxu0 %v1066
    %1068 = vmatprep.subr.mxu0 0.0
    %v1069 = vand.u32 %v713, 4294901760
    %1070 = vmatpush1.msra.mxu0 %v1069
    %1071 = vmatprep.subr.mxu0 0.0
    %v1072 = vand.u32 %v712, 4294901760
    %1073 = vmatpush1.msra.mxu0 %v1072
    %1074 = vmatprep.subr.mxu0 0.0
    %v1075 = vand.u32 %v711, 4294901760
    %1076 = vmatpush1.msra.mxu0 %v1075
    %1077 = vmatprep.subr.mxu0 0.0
    %v1078 = vand.u32 %v710, 4294901760
    %1079 = vmatpush1.msra.mxu0 %v1078
    %1080 = vmatprep.subr.mxu0 0.0
    %v1081 = vand.u32 %v709, 4294901760
    %1082 = vmatpush1.msra.mxu0 %v1081
    %1083 = vmatprep.subr.mxu0 0.0
    %v1084 = vand.u32 %v708, 4294901760
    %1085 = vmatpush1.msra.mxu0 %v1084
    %1086 = vmatprep.subr.mxu0 0.0
    %v1087 = vand.u32 %v707, 4294901760
    %1088 = vmatpush1.msra.mxu0 %v1087
    %1089 = vmatprep.subr.mxu0 0.0
    %v1090 = vand.u32 %v706, 4294901760
    %1091 = vmatpush1.msra.mxu0 %v1090
    %1092 = vmatprep.subr.mxu0 0.0
    %v1093 = vand.u32 %v705, 4294901760
    %1094 = vmatpush1.msra.mxu0 %v1093
    %1095 = vmatprep.subr.mxu0 0.0
    %v1096 = vand.u32 %v704, 4294901760
    %1097 = vmatpush1.msra.mxu0 %v1096
    %1098 = vmatprep.subr.mxu0 0.0
    %v1099 = vand.u32 %v703, 4294901760
    %1100 = vmatpush1.msra.mxu0 %v1099
    %1101 = vmatprep.subr.mxu0 0.0
    %v1102 = vand.u32 %v702, 4294901760
    %1103 = vmatpush1.msra.mxu0 %v1102
    %1104 = vmatprep.subr.mxu0 0.0
    %v1105 = vand.u32 %v701, 4294901760
    %1106 = vmatpush1.msra.mxu0 %v1105
    %1107 = vmatprep.subr.mxu0 0.0
    %v1108 = vand.u32 %v700, 4294901760
    %1109 = vmatpush1.msra.mxu0 %v1108
    %1110 = vmatprep.subr.mxu0 0.0
    %1111 = vmatpush2.msra.mxu0 0.0
    %1112 = vmatprep.subr.mxu0 0.0
    %1113 = vmatpush2.msra.mxu0 0.0
    %1114 = vmatprep.subr.mxu0 0.0
    %1115 = vmatpush2.msra.mxu0 0.0
    %1116 = vmatprep.subr.mxu0 0.0
    %1117 = vmatpush2.msra.mxu0 0.0
    %1118 = vmatprep.subr.mxu0 0.0
    %1119 = vmatpush2.msra.mxu0 0.0
    %1120 = vmatprep.subr.mxu0 0.0
    %1121 = vmatpush2.msra.mxu0 0.0
    %1122 = vmatprep.subr.mxu0 0.0
    %1123 = vmatpush2.msra.mxu0 0.0
    %1124 = vmatprep.subr.mxu0 0.0
    %1125 = vmatpush2.msra.mxu0 0.0
    %1126 = vmatprep.subr.mxu0 0.0
    %1127 = vmatpush2.msra.mxu0 0.0
    %1128 = vmatprep.subr.mxu0 0.0
    %1129 = vmatpush2.msra.mxu0 0.0
    %1130 = vmatprep.subr.mxu0 0.0
    %1131 = vmatpush2.msra.mxu0 0.0
    %1132 = vmatprep.subr.mxu0 0.0
    %1133 = vmatpush2.msra.mxu0 0.0
    %1134 = vmatprep.subr.mxu0 0.0
    %1135 = vmatpush2.msra.mxu0 0.0
    %1136 = vmatprep.subr.mxu0 0.0
    %1137 = vmatpush2.msra.mxu0 0.0
    %1138 = vmatprep.subr.mxu0 0.0
    %1139 = vmatpush2.msra.mxu0 0.0
    %1140 = vmatprep.subr.mxu0 0.0
    %1141 = vmatpush2.msra.mxu0 0.0
    %1142 = vmatprep.mubr.f32.mxu0 0.0
    %v1143 = vand.u32 %v699, 4294901760
    %v1144 = vsub.f32 %v699, %v1143
    %v1145 = vand.u32 %v1144, 4294901760
    %1146 = vmatmul.mubr.f32.gmra.mxu0 %v1145
    %v1147 = vpop.f32.mrf.mxu0
    %v1148 = vadd.f32 %v1059, %v1147
    %v1149 = vpop.f32.mrf.mxu0
    %1150 = vdwg.mxu0
    %1151 = vmatprep.subr.mxu0 0.0
    %v1152 = vand.u32 %v715, 4294901760
    %v1153 = vsub.f32 %v715, %v1152
    %v1154 = vand.u32 %v1153, 4294901760
    %1155 = vmatpush1.msra.mxu0 %v1154
    %1156 = vmatprep.subr.mxu0 0.0
    %v1157 = vand.u32 %v714, 4294901760
    %v1158 = vsub.f32 %v714, %v1157
    %v1159 = vand.u32 %v1158, 4294901760
    %1160 = vmatpush1.msra.mxu0 %v1159
    %1161 = vmatprep.subr.mxu0 0.0
    %v1162 = vand.u32 %v713, 4294901760
    %v1163 = vsub.f32 %v713, %v1162
    %v1164 = vand.u32 %v1163, 4294901760
    %1165 = vmatpush1.msra.mxu0 %v1164
    %1166 = vmatprep.subr.mxu0 0.0
    %v1167 = vand.u32 %v712, 4294901760
    %v1168 = vsub.f32 %v712, %v1167
    %v1169 = vand.u32 %v1168, 4294901760
    %1170 = vmatpush1.msra.mxu0 %v1169
    %1171 = vmatprep.subr.mxu0 0.0
    %v1172 = vand.u32 %v711, 4294901760
    %v1173 = vsub.f32 %v711, %v1172
    %v1174 = vand.u32 %v1173, 4294901760
    %1175 = vmatpush1.msra.mxu0 %v1174
    %1176 = vmatprep.subr.mxu0 0.0
    %v1177 = vand.u32 %v710, 4294901760
    %v1178 = vsub.f32 %v710, %v1177
    %v1179 = vand.u32 %v1178, 4294901760
    %1180 = vmatpush1.msra.mxu0 %v1179
    %1181 = vmatprep.subr.mxu0 0.0
    %v1182 = vand.u32 %v709, 4294901760
    %v1183 = vsub.f32 %v709, %v1182
    %v1184 = vand.u32 %v1183, 4294901760
    %1185 = vmatpush1.msra.mxu0 %v1184
    %1186 = vmatprep.subr.mxu0 0.0
    %v1187 = vand.u32 %v708, 4294901760
    %v1188 = vsub.f32 %v708, %v1187
    %v1189 = vand.u32 %v1188, 4294901760
    %1190 = vmatpush1.msra.mxu0 %v1189
    %1191 = vmatprep.subr.mxu0 0.0
    %v1192 = vand.u32 %v707, 4294901760
    %v1193 = vsub.f32 %v707, %v1192
    %v1194 = vand.u32 %v1193, 4294901760
    %1195 = vmatpush1.msra.mxu0 %v1194
    %1196 = vmatprep.subr.mxu0 0.0
    %v1197 = vand.u32 %v706, 4294901760
    %v1198 = vsub.f32 %v706, %v1197
    %v1199 = vand.u32 %v1198, 4294901760
    %1200 = vmatpush1.msra.mxu0 %v1199
    %1201 = vmatprep.subr.mxu0 0.0
    %v1202 = vand.u32 %v705, 4294901760
    %v1203 = vsub.f32 %v705, %v1202
    %v1204 = vand.u32 %v1203, 4294901760
    %1205 = vmatpush1.msra.mxu0 %v1204
    %1206 = vmatprep.subr.mxu0 0.0
    %v1207 = vand.u32 %v704, 4294901760
    %v1208 = vsub.f32 %v704, %v1207
    %v1209 = vand.u32 %v1208, 4294901760
    %1210 = vmatpush1.msra.mxu0 %v1209
    %1211 = vmatprep.subr.mxu0 0.0
    %v1212 = vand.u32 %v703, 4294901760
    %v1213 = vsub.f32 %v703, %v1212
    %v1214 = vand.u32 %v1213, 4294901760
    %1215 = vmatpush1.msra.mxu0 %v1214
    %1216 = vmatprep.subr.mxu0 0.0
    %v1217 = vand.u32 %v702, 4294901760
    %v1218 = vsub.f32 %v702, %v1217
    %v1219 = vand.u32 %v1218, 4294901760
    %1220 = vmatpush1.msra.mxu0 %v1219
    %1221 = vmatprep.subr.mxu0 0.0
    %v1222 = vand.u32 %v701, 4294901760
    %v1223 = vsub.f32 %v701, %v1222
    %v1224 = vand.u32 %v1223, 4294901760
    %1225 = vmatpush1.msra.mxu0 %v1224
    %1226 = vmatprep.subr.mxu0 0.0
    %v1227 = vand.u32 %v700, 4294901760
    %v1228 = vsub.f32 %v700, %v1227
    %v1229 = vand.u32 %v1228, 4294901760
    %1230 = vmatpush1.msra.mxu0 %v1229
    %1231 = vmatprep.subr.mxu0 0.0
    %1232 = vmatpush2.msra.mxu0 0.0
    %1233 = vmatprep.subr.mxu0 0.0
    %1234 = vmatpush2.msra.mxu0 0.0
    %1235 = vmatprep.subr.mxu0 0.0
    %1236 = vmatpush2.msra.mxu0 0.0
    %1237 = vmatprep.subr.mxu0 0.0
    %1238 = vmatpush2.msra.mxu0 0.0
    %1239 = vmatprep.subr.mxu0 0.0
    %1240 = vmatpush2.msra.mxu0 0.0
    %1241 = vmatprep.subr.mxu0 0.0
    %1242 = vmatpush2.msra.mxu0 0.0
    %1243 = vmatprep.subr.mxu0 0.0
    %1244 = vmatpush2.msra.mxu0 0.0
    %1245 = vmatprep.subr.mxu0 0.0
    %1246 = vmatpush2.msra.mxu0 0.0
    %1247 = vmatprep.subr.mxu0 0.0
    %1248 = vmatpush2.msra.mxu0 0.0
    %1249 = vmatprep.subr.mxu0 0.0
    %1250 = vmatpush2.msra.mxu0 0.0
    %1251 = vmatprep.subr.mxu0 0.0
    %1252 = vmatpush2.msra.mxu0 0.0
    %1253 = vmatprep.subr.mxu0 0.0
    %1254 = vmatpush2.msra.mxu0 0.0
    %1255 = vmatprep.subr.mxu0 0.0
    %1256 = vmatpush2.msra.mxu0 0.0
    %1257 = vmatprep.subr.mxu0 0.0
    %1258 = vmatpush2.msra.mxu0 0.0
    %1259 = vmatprep.subr.mxu0 0.0
    %1260 = vmatpush2.msra.mxu0 0.0
    %1261 = vmatprep.subr.mxu0 0.0
    %1262 = vmatpush2.msra.mxu0 0.0
    %1263 = vmatprep.mubr.f32.mxu0 0.0
    %v1264 = vand.u32 %v699, 4294901760
    %1265 = vmatmul.mubr.f32.gmra.mxu0 %v1264
    %v1266 = vpop.f32.mrf.mxu0
    %v1267 = vadd.f32 %v1148, %v1266
    %v1268 = vpop.f32.mrf.mxu0
    %1269 = vdwg.mxu0
    %1270 = vmatprep.subr.mxu0 0.0
    %v1271 = vand.u32 %v715, 4294901760
    %1272 = vmatpush1.msra.mxu0 %v1271
    %1273 = vmatprep.subr.mxu0 0.0
    %v1274 = vand.u32 %v714, 4294901760
    %1275 = vmatpush1.msra.mxu0 %v1274
    %1276 = vmatprep.subr.mxu0 0.0
    %v1277 = vand.u32 %v713, 4294901760
    %1278 = vmatpush1.msra.mxu0 %v1277
    %1279 = vmatprep.subr.mxu0 0.0
    %v1280 = vand.u32 %v712, 4294901760
    %1281 = vmatpush1.msra.mxu0 %v1280
    %1282 = vmatprep.subr.mxu0 0.0
    %v1283 = vand.u32 %v711, 4294901760
    %1284 = vmatpush1.msra.mxu0 %v1283
    %1285 = vmatprep.subr.mxu0 0.0
    %v1286 = vand.u32 %v710, 4294901760
    %1287 = vmatpush1.msra.mxu0 %v1286
    %1288 = vmatprep.subr.mxu0 0.0
    %v1289 = vand.u32 %v709, 4294901760
    %1290 = vmatpush1.msra.mxu0 %v1289
    %1291 = vmatprep.subr.mxu0 0.0
    %v1292 = vand.u32 %v708, 4294901760
    %1293 = vmatpush1.msra.mxu0 %v1292
    %1294 = vmatprep.subr.mxu0 0.0
    %v1295 = vand.u32 %v707, 4294901760
    %1296 = vmatpush1.msra.mxu0 %v1295
    %1297 = vmatprep.subr.mxu0 0.0
    %v1298 = vand.u32 %v706, 4294901760
    %1299 = vmatpush1.msra.mxu0 %v1298
    %1300 = vmatprep.subr.mxu0 0.0
    %v1301 = vand.u32 %v705, 4294901760
    %1302 = vmatpush1.msra.mxu0 %v1301
    %1303 = vmatprep.subr.mxu0 0.0
    %v1304 = vand.u32 %v704, 4294901760
    %1305 = vmatpush1.msra.mxu0 %v1304
    %1306 = vmatprep.subr.mxu0 0.0
    %v1307 = vand.u32 %v703, 4294901760
    %1308 = vmatpush1.msra.mxu0 %v1307
    %1309 = vmatprep.subr.mxu0 0.0
    %v1310 = vand.u32 %v702, 4294901760
    %1311 = vmatpush1.msra.mxu0 %v1310
    %1312 = vmatprep.subr.mxu0 0.0
    %v1313 = vand.u32 %v701, 4294901760
    %1314 = vmatpush1.msra.mxu0 %v1313
    %1315 = vmatprep.subr.mxu0 0.0
    %v1316 = vand.u32 %v700, 4294901760
    %1317 = vmatpush1.msra.mxu0 %v1316
    %1318 = vmatprep.subr.mxu0 0.0
    %1319 = vmatpush2.msra.mxu0 0.0
    %1320 = vmatprep.subr.mxu0 0.0
    %1321 = vmatpush2.msra.mxu0 0.0
    %1322 = vmatprep.subr.mxu0 0.0
    %1323 = vmatpush2.msra.mxu0 0.0
    %1324 = vmatprep.subr.mxu0 0.0
    %1325 = vmatpush2.msra.mxu0 0.0
    %1326 = vmatprep.subr.mxu0 0.0
    %1327 = vmatpush2.msra.mxu0 0.0
    %1328 = vmatprep.subr.mxu0 0.0
    %1329 = vmatpush2.msra.mxu0 0.0
    %1330 = vmatprep.subr.mxu0 0.0
    %1331 = vmatpush2.msra.mxu0 0.0
    %1332 = vmatprep.subr.mxu0 0.0
    %1333 = vmatpush2.msra.mxu0 0.0
    %1334 = vmatprep.subr.mxu0 0.0
    %1335 = vmatpush2.msra.mxu0 0.0
    %1336 = vmatprep.subr.mxu0 0.0
    %1337 = vmatpush2.msra.mxu0 0.0
    %1338 = vmatprep.subr.mxu0 0.0
    %1339 = vmatpush2.msra.mxu0 0.0
    %1340 = vmatprep.subr.mxu0 0.0
    %1341 = vmatpush2.msra.mxu0 0.0
    %1342 = vmatprep.subr.mxu0 0.0
    %1343 = vmatpush2.msra.mxu0 0.0
    %1344 = vmatprep.subr.mxu0 0.0
    %1345 = vmatpush2.msra.mxu0 0.0
    %1346 = vmatprep.subr.mxu0 0.0
    %1347 = vmatpush2.msra.mxu0 0.0
    %1348 = vmatprep.subr.mxu0 0.0
    %1349 = vmatpush2.msra.mxu0 0.0
    %1350 = vmatprep.mubr.f32.mxu0 0.0
    %v1351 = vand.u32 %v699, 4294901760
    %1352 = vmatmul.mubr.f32.gmra.mxu0 %v1351
    %v1353 = vpop.f32.mrf.mxu0
    %v1354 = vadd.f32 %v1267, %v1353
    %v1355 = vpop.f32.mrf.mxu0
    %1356 = vdwg.mxu0
    %vm1357 = vcmask 138368
    %1358 = vst.msk [vmem:[%s2] sm:$0xff] %vm1357, %v1354
    %v1359 = vld [vmem:[%s2] sm:$0xff]
    %v1360 = vld [vmem:[#allocation2] sm:$0xff]
    %v1361 = vld [vmem:[#allocation2 + $0x8] sm:$0xff]
    %v1362 = vld [vmem:[#allocation2 + $0x10] sm:$0xff]
    %v1363 = vld [vmem:[#allocation2 + $0x18] sm:$0xff]
    %v1364 = vld [vmem:[#allocation2 + $0x20] sm:$0xff]
    %v1365 = vld [vmem:[#allocation2 + $0x28] sm:$0xff]
    %v1366 = vld [vmem:[#allocation2 + $0x30] sm:$0xff]
    %v1367 = vld [vmem:[#allocation2 + $0x38] sm:$0xff]
    %v1368 = vld [vmem:[#allocation2 + $0x40] sm:$0xff]
    %v1369 = vld [vmem:[#allocation2 + $0x48] sm:$0xff]
    %v1370 = vld [vmem:[#allocation2 + $0x50] sm:$0xff]
    %v1371 = vld [vmem:[#allocation2 + $0x58] sm:$0xff]
    %v1372 = vld [vmem:[#allocation2 + $0x60] sm:$0xff]
    %v1373 = vld [vmem:[#allocation2 + $0x68] sm:$0xff]
    %v1374 = vld [vmem:[#allocation2 + $0x70] sm:$0xff]
    %v1375 = vld [vmem:[#allocation2 + $0x78] sm:$0xff]
    %1376 = vmatprep.subr.mxu0 0.0
    %v1377 = vand.u32 %v1375, 4294901760
    %1378 = vmatpush1.msra.mxu0 %v1377
    %1379 = vmatprep.subr.mxu0 0.0
    %v1380 = vand.u32 %v1374, 4294901760
    %1381 = vmatpush1.msra.mxu0 %v1380
    %1382 = vmatprep.subr.mxu0 0.0
    %v1383 = vand.u32 %v1373, 4294901760
    %1384 = vmatpush1.msra.mxu0 %v1383
    %1385 = vmatprep.subr.mxu0 0.0
    %v1386 = vand.u32 %v1372, 4294901760
    %1387 = vmatpush1.msra.mxu0 %v1386
    %1388 = vmatprep.subr.mxu0 0.0
    %v1389 = vand.u32 %v1371, 4294901760
    %1390 = vmatpush1.msra.mxu0 %v1389
    %1391 = vmatprep.subr.mxu0 0.0
    %v1392 = vand.u32 %v1370, 4294901760
    %1393 = vmatpush1.msra.mxu0 %v1392
    %1394 = vmatprep.subr.mxu0 0.0
    %v1395 = vand.u32 %v1369, 4294901760
    %1396 = vmatpush1.msra.mxu0 %v1395
    %1397 = vmatprep.subr.mxu0 0.0
    %v1398 = vand.u32 %v1368, 4294901760
    %1399 = vmatpush1.msra.mxu0 %v1398
    %1400 = vmatprep.subr.mxu0 0.0
    %v1401 = vand.u32 %v1367, 4294901760
    %1402 = vmatpush1.msra.mxu0 %v1401
    %1403 = vmatprep.subr.mxu0 0.0
    %v1404 = vand.u32 %v1366, 4294901760
    %1405 = vmatpush1.msra.mxu0 %v1404
    %1406 = vmatprep.subr.mxu0 0.0
    %v1407 = vand.u32 %v1365, 4294901760
    %1408 = vmatpush1.msra.mxu0 %v1407
    %1409 = vmatprep.subr.mxu0 0.0
    %v1410 = vand.u32 %v1364, 4294901760
    %1411 = vmatpush1.msra.mxu0 %v1410
    %1412 = vmatprep.subr.mxu0 0.0
    %v1413 = vand.u32 %v1363, 4294901760
    %1414 = vmatpush1.msra.mxu0 %v1413
    %1415 = vmatprep.subr.mxu0 0.0
    %v1416 = vand.u32 %v1362, 4294901760
    %1417 = vmatpush1.msra.mxu0 %v1416
    %1418 = vmatprep.subr.mxu0 0.0
    %v1419 = vand.u32 %v1361, 4294901760
    %1420 = vmatpush1.msra.mxu0 %v1419
    %1421 = vmatprep.subr.mxu0 0.0
    %v1422 = vand.u32 %v1360, 4294901760
    %1423 = vmatpush1.msra.mxu0 %v1422
    %1424 = vmatprep.subr.mxu0 0.0
    %1425 = vmatpush2.msra.mxu0 0.0
    %1426 = vmatprep.subr.mxu0 0.0
    %1427 = vmatpush2.msra.mxu0 0.0
    %1428 = vmatprep.subr.mxu0 0.0
    %1429 = vmatpush2.msra.mxu0 0.0
    %1430 = vmatprep.subr.mxu0 0.0
    %1431 = vmatpush2.msra.mxu0 0.0
    %1432 = vmatprep.subr.mxu0 0.0
    %1433 = vmatpush2.msra.mxu0 0.0
    %1434 = vmatprep.subr.mxu0 0.0
    %1435 = vmatpush2.msra.mxu0 0.0
    %1436 = vmatprep.subr.mxu0 0.0
    %1437 = vmatpush2.msra.mxu0 0.0
    %1438 = vmatprep.subr.mxu0 0.0
    %1439 = vmatpush2.msra.mxu0 0.0
    %1440 = vmatprep.subr.mxu0 0.0
    %1441 = vmatpush2.msra.mxu0 0.0
    %1442 = vmatprep.subr.mxu0 0.0
    %1443 = vmatpush2.msra.mxu0 0.0
    %1444 = vmatprep.subr.mxu0 0.0
    %1445 = vmatpush2.msra.mxu0 0.0
    %1446 = vmatprep.subr.mxu0 0.0
    %1447 = vmatpush2.msra.mxu0 0.0
    %1448 = vmatprep.subr.mxu0 0.0
    %1449 = vmatpush2.msra.mxu0 0.0
    %1450 = vmatprep.subr.mxu0 0.0
    %1451 = vmatpush2.msra.mxu0 0.0
    %1452 = vmatprep.subr.mxu0 0.0
    %1453 = vmatpush2.msra.mxu0 0.0
    %1454 = vmatprep.subr.mxu0 0.0
    %1455 = vmatpush2.msra.mxu0 0.0
    %1456 = vmatprep.mubr.f32.mxu0 0.0
    %v1457 = vand.u32 %v1359, 4294901760
    %v1458 = vsub.f32 %v1359, %v1457
    %v1459 = vand.u32 %v1458, 4294901760
    %v1460 = vsub.f32 %v1458, %v1459
    %v1461 = vand.u32 %v1460, 4294901760
    %1462 = vmatmul.mubr.f32.gmra.mxu0 %v1461
    %v1463 = vpop.f32.mrf.mxu0
    %v1464 = vadd.f32 0.0, %v1463
    %v1465 = vpop.f32.mrf.mxu0
    %1466 = vdwg.mxu0
    %1467 = vmatprep.subr.mxu0 0.0
    %v1468 = vand.u32 %v1375, 4294901760
    %v1469 = vsub.f32 %v1375, %v1468
    %v1470 = vand.u32 %v1469, 4294901760
    %v1471 = vsub.f32 %v1469, %v1470
    %v1472 = vand.u32 %v1471, 4294901760
    %1473 = vmatpush1.msra.mxu0 %v1472
    %1474 = vmatprep.subr.mxu0 0.0
    %v1475 = vand.u32 %v1374, 4294901760
    %v1476 = vsub.f32 %v1374, %v1475
    %v1477 = vand.u32 %v1476, 4294901760
    %v1478 = vsub.f32 %v1476, %v1477
    %v1479 = vand.u32 %v1478, 4294901760
    %1480 = vmatpush1.msra.mxu0 %v1479
    %1481 = vmatprep.subr.mxu0 0.0
    %v1482 = vand.u32 %v1373, 4294901760
    %v1483 = vsub.f32 %v1373, %v1482
    %v1484 = vand.u32 %v1483, 4294901760
    %v1485 = vsub.f32 %v1483, %v1484
    %v1486 = vand.u32 %v1485, 4294901760
    %1487 = vmatpush1.msra.mxu0 %v1486
    %1488 = vmatprep.subr.mxu0 0.0
    %v1489 = vand.u32 %v1372, 4294901760
    %v1490 = vsub.f32 %v1372, %v1489
    %v1491 = vand.u32 %v1490, 4294901760
    %v1492 = vsub.f32 %v1490, %v1491
    %v1493 = vand.u32 %v1492, 4294901760
    %1494 = vmatpush1.msra.mxu0 %v1493
    %1495 = vmatprep.subr.mxu0 0.0
    %v1496 = vand.u32 %v1371, 4294901760
    %v1497 = vsub.f32 %v1371, %v1496
    %v1498 = vand.u32 %v1497, 4294901760
    %v1499 = vsub.f32 %v1497, %v1498
    %v1500 = vand.u32 %v1499, 4294901760
    %1501 = vmatpush1.msra.mxu0 %v1500
    %1502 = vmatprep.subr.mxu0 0.0
    %v1503 = vand.u32 %v1370, 4294901760
    %v1504 = vsub.f32 %v1370, %v1503
    %v1505 = vand.u32 %v1504, 4294901760
    %v1506 = vsub.f32 %v1504, %v1505
    %v1507 = vand.u32 %v1506, 4294901760
    %1508 = vmatpush1.msra.mxu0 %v1507
    %1509 = vmatprep.subr.mxu0 0.0
    %v1510 = vand.u32 %v1369, 4294901760
    %v1511 = vsub.f32 %v1369, %v1510
    %v1512 = vand.u32 %v1511, 4294901760
    %v1513 = vsub.f32 %v1511, %v1512
    %v1514 = vand.u32 %v1513, 4294901760
    %1515 = vmatpush1.msra.mxu0 %v1514
    %1516 = vmatprep.subr.mxu0 0.0
    %v1517 = vand.u32 %v1368, 4294901760
    %v1518 = vsub.f32 %v1368, %v1517
    %v1519 = vand.u32 %v1518, 4294901760
    %v1520 = vsub.f32 %v1518, %v1519
    %v1521 = vand.u32 %v1520, 4294901760
    %1522 = vmatpush1.msra.mxu0 %v1521
    %1523 = vmatprep.subr.mxu0 0.0
    %v1524 = vand.u32 %v1367, 4294901760
    %v1525 = vsub.f32 %v1367, %v1524
    %v1526 = vand.u32 %v1525, 4294901760
    %v1527 = vsub.f32 %v1525, %v1526
    %v1528 = vand.u32 %v1527, 4294901760
    %1529 = vmatpush1.msra.mxu0 %v1528
    %1530 = vmatprep.subr.mxu0 0.0
    %v1531 = vand.u32 %v1366, 4294901760
    %v1532 = vsub.f32 %v1366, %v1531
    %v1533 = vand.u32 %v1532, 4294901760
    %v1534 = vsub.f32 %v1532, %v1533
    %v1535 = vand.u32 %v1534, 4294901760
    %1536 = vmatpush1.msra.mxu0 %v1535
    %1537 = vmatprep.subr.mxu0 0.0
    %v1538 = vand.u32 %v1365, 4294901760
    %v1539 = vsub.f32 %v1365, %v1538
    %v1540 = vand.u32 %v1539, 4294901760
    %v1541 = vsub.f32 %v1539, %v1540
    %v1542 = vand.u32 %v1541, 4294901760
    %1543 = vmatpush1.msra.mxu0 %v1542
    %1544 = vmatprep.subr.mxu0 0.0
    %v1545 = vand.u32 %v1364, 4294901760
    %v1546 = vsub.f32 %v1364, %v1545
    %v1547 = vand.u32 %v1546, 4294901760
    %v1548 = vsub.f32 %v1546, %v1547
    %v1549 = vand.u32 %v1548, 4294901760
    %1550 = vmatpush1.msra.mxu0 %v1549
    %1551 = vmatprep.subr.mxu0 0.0
    %v1552 = vand.u32 %v1363, 4294901760
    %v1553 = vsub.f32 %v1363, %v1552
    %v1554 = vand.u32 %v1553, 4294901760
    %v1555 = vsub.f32 %v1553, %v1554
    %v1556 = vand.u32 %v1555, 4294901760
    %1557 = vmatpush1.msra.mxu0 %v1556
    %1558 = vmatprep.subr.mxu0 0.0
    %v1559 = vand.u32 %v1362, 4294901760
    %v1560 = vsub.f32 %v1362, %v1559
    %v1561 = vand.u32 %v1560, 4294901760
    %v1562 = vsub.f32 %v1560, %v1561
    %v1563 = vand.u32 %v1562, 4294901760
    %1564 = vmatpush1.msra.mxu0 %v1563
    %1565 = vmatprep.subr.mxu0 0.0
    %v1566 = vand.u32 %v1361, 4294901760
    %v1567 = vsub.f32 %v1361, %v1566
    %v1568 = vand.u32 %v1567, 4294901760
    %v1569 = vsub.f32 %v1567, %v1568
    %v1570 = vand.u32 %v1569, 4294901760
    %1571 = vmatpush1.msra.mxu0 %v1570
    %1572 = vmatprep.subr.mxu0 0.0
    %v1573 = vand.u32 %v1360, 4294901760
    %v1574 = vsub.f32 %v1360, %v1573
    %v1575 = vand.u32 %v1574, 4294901760
    %v1576 = vsub.f32 %v1574, %v1575
    %v1577 = vand.u32 %v1576, 4294901760
    %1578 = vmatpush1.msra.mxu0 %v1577
    %1579 = vmatprep.subr.mxu0 0.0
    %1580 = vmatpush2.msra.mxu0 0.0
    %1581 = vmatprep.subr.mxu0 0.0
    %1582 = vmatpush2.msra.mxu0 0.0
    %1583 = vmatprep.subr.mxu0 0.0
    %1584 = vmatpush2.msra.mxu0 0.0
    %1585 = vmatprep.subr.mxu0 0.0
    %1586 = vmatpush2.msra.mxu0 0.0
    %1587 = vmatprep.subr.mxu0 0.0
    %1588 = vmatpush2.msra.mxu0 0.0
    %1589 = vmatprep.subr.mxu0 0.0
    %1590 = vmatpush2.msra.mxu0 0.0
    %1591 = vmatprep.subr.mxu0 0.0
    %1592 = vmatpush2.msra.mxu0 0.0
    %1593 = vmatprep.subr.mxu0 0.0
    %1594 = vmatpush2.msra.mxu0 0.0
    %1595 = vmatprep.subr.mxu0 0.0
    %1596 = vmatpush2.msra.mxu0 0.0
    %1597 = vmatprep.subr.mxu0 0.0
    %1598 = vmatpush2.msra.mxu0 0.0
    %1599 = vmatprep.subr.mxu0 0.0
    %1600 = vmatpush2.msra.mxu0 0.0
    %1601 = vmatprep.subr.mxu0 0.0
    %1602 = vmatpush2.msra.mxu0 0.0
    %1603 = vmatprep.subr.mxu0 0.0
    %1604 = vmatpush2.msra.mxu0 0.0
    %1605 = vmatprep.subr.mxu0 0.0
    %1606 = vmatpush2.msra.mxu0 0.0
    %1607 = vmatprep.subr.mxu0 0.0
    %1608 = vmatpush2.msra.mxu0 0.0
    %1609 = vmatprep.subr.mxu0 0.0
    %1610 = vmatpush2.msra.mxu0 0.0
    %1611 = vmatprep.mubr.f32.mxu0 0.0
    %v1612 = vand.u32 %v1359, 4294901760
    %1613 = vmatmul.mubr.f32.gmra.mxu0 %v1612
    %v1614 = vpop.f32.mrf.mxu0
    %v1615 = vadd.f32 %v1464, %v1614
    %v1616 = vpop.f32.mrf.mxu0
    %1617 = vdwg.mxu0
    %1618 = vmatprep.subr.mxu0 0.0
    %v1619 = vand.u32 %v1375, 4294901760
    %v1620 = vsub.f32 %v1375, %v1619
    %1621 = vmatpush1.msra.mxu0 %v1620
    %1622 = vmatprep.subr.mxu0 0.0
    %v1623 = vand.u32 %v1374, 4294901760
    %v1624 = vsub.f32 %v1374, %v1623
    %1625 = vmatpush1.msra.mxu0 %v1624
    %1626 = vmatprep.subr.mxu0 0.0
    %v1627 = vand.u32 %v1373, 4294901760
    %v1628 = vsub.f32 %v1373, %v1627
    %1629 = vmatpush1.msra.mxu0 %v1628
    %1630 = vmatprep.subr.mxu0 0.0
    %v1631 = vand.u32 %v1372, 4294901760
    %v1632 = vsub.f32 %v1372, %v1631
    %1633 = vmatpush1.msra.mxu0 %v1632
    %1634 = vmatprep.subr.mxu0 0.0
    %v1635 = vand.u32 %v1371, 4294901760
    %v1636 = vsub.f32 %v1371, %v1635
    %1637 = vmatpush1.msra.mxu0 %v1636
    %1638 = vmatprep.subr.mxu0 0.0
    %v1639 = vand.u32 %v1370, 4294901760
    %v1640 = vsub.f32 %v1370, %v1639
    %1641 = vmatpush1.msra.mxu0 %v1640
    %1642 = vmatprep.subr.mxu0 0.0
    %v1643 = vand.u32 %v1369, 4294901760
    %v1644 = vsub.f32 %v1369, %v1643
    %1645 = vmatpush1.msra.mxu0 %v1644
    %1646 = vmatprep.subr.mxu0 0.0
    %v1647 = vand.u32 %v1368, 4294901760
    %v1648 = vsub.f32 %v1368, %v1647
    %1649 = vmatpush1.msra.mxu0 %v1648
    %1650 = vmatprep.subr.mxu0 0.0
    %v1651 = vand.u32 %v1367, 4294901760
    %v1652 = vsub.f32 %v1367, %v1651
    %1653 = vmatpush1.msra.mxu0 %v1652
    %1654 = vmatprep.subr.mxu0 0.0
    %v1655 = vand.u32 %v1366, 4294901760
    %v1656 = vsub.f32 %v1366, %v1655
    %1657 = vmatpush1.msra.mxu0 %v1656
    %1658 = vmatprep.subr.mxu0 0.0
    %v1659 = vand.u32 %v1365, 4294901760
    %v1660 = vsub.f32 %v1365, %v1659
    %1661 = vmatpush1.msra.mxu0 %v1660
    %1662 = vmatprep.subr.mxu0 0.0
    %v1663 = vand.u32 %v1364, 4294901760
    %v1664 = vsub.f32 %v1364, %v1663
    %1665 = vmatpush1.msra.mxu0 %v1664
    %1666 = vmatprep.subr.mxu0 0.0
    %v1667 = vand.u32 %v1363, 4294901760
    %v1668 = vsub.f32 %v1363, %v1667
    %1669 = vmatpush1.msra.mxu0 %v1668
    %1670 = vmatprep.subr.mxu0 0.0
    %v1671 = vand.u32 %v1362, 4294901760
    %v1672 = vsub.f32 %v1362, %v1671
    %1673 = vmatpush1.msra.mxu0 %v1672
    %1674 = vmatprep.subr.mxu0 0.0
    %v1675 = vand.u32 %v1361, 4294901760
    %v1676 = vsub.f32 %v1361, %v1675
    %1677 = vmatpush1.msra.mxu0 %v1676
    %1678 = vmatprep.subr.mxu0 0.0
    %v1679 = vand.u32 %v1360, 4294901760
    %v1680 = vsub.f32 %v1360, %v1679
    %1681 = vmatpush1.msra.mxu0 %v1680
    %1682 = vmatprep.subr.mxu0 0.0
    %1683 = vmatpush2.msra.mxu0 0.0
    %1684 = vmatprep.subr.mxu0 0.0
    %1685 = vmatpush2.msra.mxu0 0.0
    %1686 = vmatprep.subr.mxu0 0.0
    %1687 = vmatpush2.msra.mxu0 0.0
    %1688 = vmatprep.subr.mxu0 0.0
    %1689 = vmatpush2.msra.mxu0 0.0
    %1690 = vmatprep.subr.mxu0 0.0
    %1691 = vmatpush2.msra.mxu0 0.0
    %1692 = vmatprep.subr.mxu0 0.0
    %1693 = vmatpush2.msra.mxu0 0.0
    %1694 = vmatprep.subr.mxu0 0.0
    %1695 = vmatpush2.msra.mxu0 0.0
    %1696 = vmatprep.subr.mxu0 0.0
    %1697 = vmatpush2.msra.mxu0 0.0
    %1698 = vmatprep.subr.mxu0 0.0
    %1699 = vmatpush2.msra.mxu0 0.0
    %1700 = vmatprep.subr.mxu0 0.0
    %1701 = vmatpush2.msra.mxu0 0.0
    %1702 = vmatprep.subr.mxu0 0.0
    %1703 = vmatpush2.msra.mxu0 0.0
    %1704 = vmatprep.subr.mxu0 0.0
    %1705 = vmatpush2.msra.mxu0 0.0
    %1706 = vmatprep.subr.mxu0 0.0
    %1707 = vmatpush2.msra.mxu0 0.0
    %1708 = vmatprep.subr.mxu0 0.0
    %1709 = vmatpush2.msra.mxu0 0.0
    %1710 = vmatprep.subr.mxu0 0.0
    %1711 = vmatpush2.msra.mxu0 0.0
    %1712 = vmatprep.subr.mxu0 0.0
    %1713 = vmatpush2.msra.mxu0 0.0
    %1714 = vmatprep.mubr.f32.mxu0 0.0
    %v1715 = vand.u32 %v1359, 4294901760
    %v1716 = vsub.f32 %v1359, %v1715
    %1717 = vmatmul.mubr.f32.gmra.mxu0 %v1716
    %v1718 = vpop.f32.mrf.mxu0
    %v1719 = vadd.f32 %v1615, %v1718
    %v1720 = vpop.f32.mrf.mxu0
    %1721 = vdwg.mxu0
    %1722 = vmatprep.subr.mxu0 0.0
    %v1723 = vand.u32 %v1375, 4294901760
    %1724 = vmatpush1.msra.mxu0 %v1723
    %1725 = vmatprep.subr.mxu0 0.0
    %v1726 = vand.u32 %v1374, 4294901760
    %1727 = vmatpush1.msra.mxu0 %v1726
    %1728 = vmatprep.subr.mxu0 0.0
    %v1729 = vand.u32 %v1373, 4294901760
    %1730 = vmatpush1.msra.mxu0 %v1729
    %1731 = vmatprep.subr.mxu0 0.0
    %v1732 = vand.u32 %v1372, 4294901760
    %1733 = vmatpush1.msra.mxu0 %v1732
    %1734 = vmatprep.subr.mxu0 0.0
    %v1735 = vand.u32 %v1371, 4294901760
    %1736 = vmatpush1.msra.mxu0 %v1735
    %1737 = vmatprep.subr.mxu0 0.0
    %v1738 = vand.u32 %v1370, 4294901760
    %1739 = vmatpush1.msra.mxu0 %v1738
    %1740 = vmatprep.subr.mxu0 0.0
    %v1741 = vand.u32 %v1369, 4294901760
    %1742 = vmatpush1.msra.mxu0 %v1741
    %1743 = vmatprep.subr.mxu0 0.0
    %v1744 = vand.u32 %v1368, 4294901760
    %1745 = vmatpush1.msra.mxu0 %v1744
    %1746 = vmatprep.subr.mxu0 0.0
    %v1747 = vand.u32 %v1367, 4294901760
    %1748 = vmatpush1.msra.mxu0 %v1747
    %1749 = vmatprep.subr.mxu0 0.0
    %v1750 = vand.u32 %v1366, 4294901760
    %1751 = vmatpush1.msra.mxu0 %v1750
    %1752 = vmatprep.subr.mxu0 0.0
    %v1753 = vand.u32 %v1365, 4294901760
    %1754 = vmatpush1.msra.mxu0 %v1753
    %1755 = vmatprep.subr.mxu0 0.0
    %v1756 = vand.u32 %v1364, 4294901760
    %1757 = vmatpush1.msra.mxu0 %v1756
    %1758 = vmatprep.subr.mxu0 0.0
    %v1759 = vand.u32 %v1363, 4294901760
    %1760 = vmatpush1.msra.mxu0 %v1759
    %1761 = vmatprep.subr.mxu0 0.0
    %v1762 = vand.u32 %v1362, 4294901760
    %1763 = vmatpush1.msra.mxu0 %v1762
    %1764 = vmatprep.subr.mxu0 0.0
    %v1765 = vand.u32 %v1361, 4294901760
    %1766 = vmatpush1.msra.mxu0 %v1765
    %1767 = vmatprep.subr.mxu0 0.0
    %v1768 = vand.u32 %v1360, 4294901760
    %1769 = vmatpush1.msra.mxu0 %v1768
    %1770 = vmatprep.subr.mxu0 0.0
    %1771 = vmatpush2.msra.mxu0 0.0
    %1772 = vmatprep.subr.mxu0 0.0
    %1773 = vmatpush2.msra.mxu0 0.0
    %1774 = vmatprep.subr.mxu0 0.0
    %1775 = vmatpush2.msra.mxu0 0.0
    %1776 = vmatprep.subr.mxu0 0.0
    %1777 = vmatpush2.msra.mxu0 0.0
    %1778 = vmatprep.subr.mxu0 0.0
    %1779 = vmatpush2.msra.mxu0 0.0
    %1780 = vmatprep.subr.mxu0 0.0
    %1781 = vmatpush2.msra.mxu0 0.0
    %1782 = vmatprep.subr.mxu0 0.0
    %1783 = vmatpush2.msra.mxu0 0.0
    %1784 = vmatprep.subr.mxu0 0.0
    %1785 = vmatpush2.msra.mxu0 0.0
    %1786 = vmatprep.subr.mxu0 0.0
    %1787 = vmatpush2.msra.mxu0 0.0
    %1788 = vmatprep.subr.mxu0 0.0
    %1789 = vmatpush2.msra.mxu0 0.0
    %1790 = vmatprep.subr.mxu0 0.0
    %1791 = vmatpush2.msra.mxu0 0.0
    %1792 = vmatprep.subr.mxu0 0.0
    %1793 = vmatpush2.msra.mxu0 0.0
    %1794 = vmatprep.subr.mxu0 0.0
    %1795 = vmatpush2.msra.mxu0 0.0
    %1796 = vmatprep.subr.mxu0 0.0
    %1797 = vmatpush2.msra.mxu0 0.0
    %1798 = vmatprep.subr.mxu0 0.0
    %1799 = vmatpush2.msra.mxu0 0.0
    %1800 = vmatprep.subr.mxu0 0.0
    %1801 = vmatpush2.msra.mxu0 0.0
    %1802 = vmatprep.mubr.f32.mxu0 0.0
    %v1803 = vand.u32 %v1359, 4294901760
    %v1804 = vsub.f32 %v1359, %v1803
    %v1805 = vand.u32 %v1804, 4294901760
    %1806 = vmatmul.mubr.f32.gmra.mxu0 %v1805
    %v1807 = vpop.f32.mrf.mxu0
    %v1808 = vadd.f32 %v1719, %v1807
    %v1809 = vpop.f32.mrf.mxu0
    %1810 = vdwg.mxu0
    %1811 = vmatprep.subr.mxu0 0.0
    %v1812 = vand.u32 %v1375, 4294901760
    %v1813 = vsub.f32 %v1375, %v1812
    %v1814 = vand.u32 %v1813, 4294901760
    %1815 = vmatpush1.msra.mxu0 %v1814
    %1816 = vmatprep.subr.mxu0 0.0
    %v1817 = vand.u32 %v1374, 4294901760
    %v1818 = vsub.f32 %v1374, %v1817
    %v1819 = vand.u32 %v1818, 4294901760
    %1820 = vmatpush1.msra.mxu0 %v1819
    %1821 = vmatprep.subr.mxu0 0.0
    %v1822 = vand.u32 %v1373, 4294901760
    %v1823 = vsub.f32 %v1373, %v1822
    %v1824 = vand.u32 %v1823, 4294901760
    %1825 = vmatpush1.msra.mxu0 %v1824
    %1826 = vmatprep.subr.mxu0 0.0
    %v1827 = vand.u32 %v1372, 4294901760
    %v1828 = vsub.f32 %v1372, %v1827
    %v1829 = vand.u32 %v1828, 4294901760
    %1830 = vmatpush1.msra.mxu0 %v1829
    %1831 = vmatprep.subr.mxu0 0.0
    %v1832 = vand.u32 %v1371, 4294901760
    %v1833 = vsub.f32 %v1371, %v1832
    %v1834 = vand.u32 %v1833, 4294901760
    %1835 = vmatpush1.msra.mxu0 %v1834
    %1836 = vmatprep.subr.mxu0 0.0
    %v1837 = vand.u32 %v1370, 4294901760
    %v1838 = vsub.f32 %v1370, %v1837
    %v1839 = vand.u32 %v1838, 4294901760
    %1840 = vmatpush1.msra.mxu0 %v1839
    %1841 = vmatprep.subr.mxu0 0.0
    %v1842 = vand.u32 %v1369, 4294901760
    %v1843 = vsub.f32 %v1369, %v1842
    %v1844 = vand.u32 %v1843, 4294901760
    %1845 = vmatpush1.msra.mxu0 %v1844
    %1846 = vmatprep.subr.mxu0 0.0
    %v1847 = vand.u32 %v1368, 4294901760
    %v1848 = vsub.f32 %v1368, %v1847
    %v1849 = vand.u32 %v1848, 4294901760
    %1850 = vmatpush1.msra.mxu0 %v1849
    %1851 = vmatprep.subr.mxu0 0.0
    %v1852 = vand.u32 %v1367, 4294901760
    %v1853 = vsub.f32 %v1367, %v1852
    %v1854 = vand.u32 %v1853, 4294901760
    %1855 = vmatpush1.msra.mxu0 %v1854
    %1856 = vmatprep.subr.mxu0 0.0
    %v1857 = vand.u32 %v1366, 4294901760
    %v1858 = vsub.f32 %v1366, %v1857
    %v1859 = vand.u32 %v1858, 4294901760
    %1860 = vmatpush1.msra.mxu0 %v1859
    %1861 = vmatprep.subr.mxu0 0.0
    %v1862 = vand.u32 %v1365, 4294901760
    %v1863 = vsub.f32 %v1365, %v1862
    %v1864 = vand.u32 %v1863, 4294901760
    %1865 = vmatpush1.msra.mxu0 %v1864
    %1866 = vmatprep.subr.mxu0 0.0
    %v1867 = vand.u32 %v1364, 4294901760
    %v1868 = vsub.f32 %v1364, %v1867
    %v1869 = vand.u32 %v1868, 4294901760
    %1870 = vmatpush1.msra.mxu0 %v1869
    %1871 = vmatprep.subr.mxu0 0.0
    %v1872 = vand.u32 %v1363, 4294901760
    %v1873 = vsub.f32 %v1363, %v1872
    %v1874 = vand.u32 %v1873, 4294901760
    %1875 = vmatpush1.msra.mxu0 %v1874
    %1876 = vmatprep.subr.mxu0 0.0
    %v1877 = vand.u32 %v1362, 4294901760
    %v1878 = vsub.f32 %v1362, %v1877
    %v1879 = vand.u32 %v1878, 4294901760
    %1880 = vmatpush1.msra.mxu0 %v1879
    %1881 = vmatprep.subr.mxu0 0.0
    %v1882 = vand.u32 %v1361, 4294901760
    %v1883 = vsub.f32 %v1361, %v1882
    %v1884 = vand.u32 %v1883, 4294901760
    %1885 = vmatpush1.msra.mxu0 %v1884
    %1886 = vmatprep.subr.mxu0 0.0
    %v1887 = vand.u32 %v1360, 4294901760
    %v1888 = vsub.f32 %v1360, %v1887
    %v1889 = vand.u32 %v1888, 4294901760
    %1890 = vmatpush1.msra.mxu0 %v1889
    %1891 = vmatprep.subr.mxu0 0.0
    %1892 = vmatpush2.msra.mxu0 0.0
    %1893 = vmatprep.subr.mxu0 0.0
    %1894 = vmatpush2.msra.mxu0 0.0
    %1895 = vmatprep.subr.mxu0 0.0
    %1896 = vmatpush2.msra.mxu0 0.0
    %1897 = vmatprep.subr.mxu0 0.0
    %1898 = vmatpush2.msra.mxu0 0.0
    %1899 = vmatprep.subr.mxu0 0.0
    %1900 = vmatpush2.msra.mxu0 0.0
    %1901 = vmatprep.subr.mxu0 0.0
    %1902 = vmatpush2.msra.mxu0 0.0
    %1903 = vmatprep.subr.mxu0 0.0
    %1904 = vmatpush2.msra.mxu0 0.0
    %1905 = vmatprep.subr.mxu0 0.0
    %1906 = vmatpush2.msra.mxu0 0.0
    %1907 = vmatprep.subr.mxu0 0.0
    %1908 = vmatpush2.msra.mxu0 0.0
    %1909 = vmatprep.subr.mxu0 0.0
    %1910 = vmatpush2.msra.mxu0 0.0
    %1911 = vmatprep.subr.mxu0 0.0
    %1912 = vmatpush2.msra.mxu0 0.0
    %1913 = vmatprep.subr.mxu0 0.0
    %1914 = vmatpush2.msra.mxu0 0.0
    %1915 = vmatprep.subr.mxu0 0.0
    %1916 = vmatpush2.msra.mxu0 0.0
    %1917 = vmatprep.subr.mxu0 0.0
    %1918 = vmatpush2.msra.mxu0 0.0
    %1919 = vmatprep.subr.mxu0 0.0
    %1920 = vmatpush2.msra.mxu0 0.0
    %1921 = vmatprep.subr.mxu0 0.0
    %1922 = vmatpush2.msra.mxu0 0.0
    %1923 = vmatprep.mubr.f32.mxu0 0.0
    %v1924 = vand.u32 %v1359, 4294901760
    %1925 = vmatmul.mubr.f32.gmra.mxu0 %v1924
    %v1926 = vpop.f32.mrf.mxu0
    %v1927 = vadd.f32 %v1808, %v1926
    %v1928 = vpop.f32.mrf.mxu0
    %1929 = vdwg.mxu0
    %1930 = vmatprep.subr.mxu0 0.0
    %v1931 = vand.u32 %v1375, 4294901760
    %1932 = vmatpush1.msra.mxu0 %v1931
    %1933 = vmatprep.subr.mxu0 0.0
    %v1934 = vand.u32 %v1374, 4294901760
    %1935 = vmatpush1.msra.mxu0 %v1934
    %1936 = vmatprep.subr.mxu0 0.0
    %v1937 = vand.u32 %v1373, 4294901760
    %1938 = vmatpush1.msra.mxu0 %v1937
    %1939 = vmatprep.subr.mxu0 0.0
    %v1940 = vand.u32 %v1372, 4294901760
    %1941 = vmatpush1.msra.mxu0 %v1940
    %1942 = vmatprep.subr.mxu0 0.0
    %v1943 = vand.u32 %v1371, 4294901760
    %1944 = vmatpush1.msra.mxu0 %v1943
    %1945 = vmatprep.subr.mxu0 0.0
    %v1946 = vand.u32 %v1370, 4294901760
    %1947 = vmatpush1.msra.mxu0 %v1946
    %1948 = vmatprep.subr.mxu0 0.0
    %v1949 = vand.u32 %v1369, 4294901760
    %1950 = vmatpush1.msra.mxu0 %v1949
    %1951 = vmatprep.subr.mxu0 0.0
    %v1952 = vand.u32 %v1368, 4294901760
    %1953 = vmatpush1.msra.mxu0 %v1952
    %1954 = vmatprep.subr.mxu0 0.0
    %v1955 = vand.u32 %v1367, 4294901760
    %1956 = vmatpush1.msra.mxu0 %v1955
    %1957 = vmatprep.subr.mxu0 0.0
    %v1958 = vand.u32 %v1366, 4294901760
    %1959 = vmatpush1.msra.mxu0 %v1958
    %1960 = vmatprep.subr.mxu0 0.0
    %v1961 = vand.u32 %v1365, 4294901760
    %1962 = vmatpush1.msra.mxu0 %v1961
    %1963 = vmatprep.subr.mxu0 0.0
    %v1964 = vand.u32 %v1364, 4294901760
    %1965 = vmatpush1.msra.mxu0 %v1964
    %1966 = vmatprep.subr.mxu0 0.0
    %v1967 = vand.u32 %v1363, 4294901760
    %1968 = vmatpush1.msra.mxu0 %v1967
    %1969 = vmatprep.subr.mxu0 0.0
    %v1970 = vand.u32 %v1362, 4294901760
    %1971 = vmatpush1.msra.mxu0 %v1970
    %1972 = vmatprep.subr.mxu0 0.0
    %v1973 = vand.u32 %v1361, 4294901760
    %1974 = vmatpush1.msra.mxu0 %v1973
    %1975 = vmatprep.subr.mxu0 0.0
    %v1976 = vand.u32 %v1360, 4294901760
    %1977 = vmatpush1.msra.mxu0 %v1976
    %1978 = vmatprep.subr.mxu0 0.0
    %1979 = vmatpush2.msra.mxu0 0.0
    %1980 = vmatprep.subr.mxu0 0.0
    %1981 = vmatpush2.msra.mxu0 0.0
    %1982 = vmatprep.subr.mxu0 0.0
    %1983 = vmatpush2.msra.mxu0 0.0
    %1984 = vmatprep.subr.mxu0 0.0
    %1985 = vmatpush2.msra.mxu0 0.0
    %1986 = vmatprep.subr.mxu0 0.0
    %1987 = vmatpush2.msra.mxu0 0.0
    %1988 = vmatprep.subr.mxu0 0.0
    %1989 = vmatpush2.msra.mxu0 0.0
    %1990 = vmatprep.subr.mxu0 0.0
    %1991 = vmatpush2.msra.mxu0 0.0
    %1992 = vmatprep.subr.mxu0 0.0
    %1993 = vmatpush2.msra.mxu0 0.0
    %1994 = vmatprep.subr.mxu0 0.0
    %1995 = vmatpush2.msra.mxu0 0.0
    %1996 = vmatprep.subr.mxu0 0.0
    %1997 = vmatpush2.msra.mxu0 0.0
    %1998 = vmatprep.subr.mxu0 0.0
    %1999 = vmatpush2.msra.mxu0 0.0
    %2000 = vmatprep.subr.mxu0 0.0
    %2001 = vmatpush2.msra.mxu0 0.0
    %2002 = vmatprep.subr.mxu0 0.0
    %2003 = vmatpush2.msra.mxu0 0.0
    %2004 = vmatprep.subr.mxu0 0.0
    %2005 = vmatpush2.msra.mxu0 0.0
    %2006 = vmatprep.subr.mxu0 0.0
    %2007 = vmatpush2.msra.mxu0 0.0
    %2008 = vmatprep.subr.mxu0 0.0
    %2009 = vmatpush2.msra.mxu0 0.0
    %2010 = vmatprep.mubr.f32.mxu0 0.0
    %v2011 = vand.u32 %v1359, 4294901760
    %2012 = vmatmul.mubr.f32.gmra.mxu0 %v2011
    %v2013 = vpop.f32.mrf.mxu0
    %v2014 = vadd.f32 %v1927, %v2013
    %v2015 = vpop.f32.mrf.mxu0
    %2016 = vdwg.mxu0
    %v2017 = vxor.u32 %v2014, 2147483648
    %v2018 = vmul.f32 %v2017, 1.442695
    %v2019 = vpow.pop %v2018
    %v2020 = vadd.f32 %v2019, 1.0
    %v2021 = vrcp.pop %v2020
    %v2022 = vmul.f32 1.0, %v2021
    %vm2023 = vcmask 154760
    %2024 = vst.msk [vmem:[%s2] sm:$0xff] %vm2023, %v2022
    %v2025 = vtanh.pop %v2014
    %vm2026 = vcmask 171160
    %2027 = vst.msk [vmem:[%s2] sm:$0xff] %vm2026, %v2025
    %v2028 = vmax.f32 %v2014, 0.0
    %vm2029 = vcmask 179368
    %2030 = vst.msk [vmem:[%s2] sm:$0xff] %vm2029, %v2028
    %vm2031 = vcmask 187568
    %2032 = vst.msk [vmem:[%s2] sm:$0xff] %vm2031, %v2014
    // Predicated region
    $region14: #{run.1} parent=1 // pred_check
      _
    $region15: #{run.1} parent=1 // pred_check_branch
      %2034 = sbr.rel (0) target = $region17
    $region16: #{run.1} parent=1 // pred_region
      _
    $region17: #{run.1} parent=1 // pred_fallthru
      _
    // Predicated region
    $region18: #{run.1} parent=1 // pred_check
      _
    $region19: #{run.1} parent=1 // pred_check_branch
      %2036 = sbr.rel (0) target = $region21
    $region20: #{run.1} parent=1 // pred_region
      _
    $region21: #{run.1} parent=1 // pred_fallthru
      _
    %2037 = vsyncpa [#allocation3], 1

</llo_original>
